<compile_context>
chip_gen: v5e
topology: v5e:2x2
jax: 0.10.0
libtpu: 0.0.40
codegen_flags: <defaults>
</compile_context>

<pallas_src>
import functools
import math

import jax
import jax.numpy as jnp
from jax.experimental import pallas as pl
from jax.experimental.pallas import tpu as pltpu

# ----------------------- model config (small, synthetic) -----------------------
NUM_LAYERS = 2
EMBED_DIM = 32
FFN_DIM = EMBED_DIM * 4          # ffn_embed_dim = 4 * embed_dim
NUM_HEADS = 4
HEAD_DIM = EMBED_DIM // NUM_HEADS
ALPHABET_SIZE = 24
PADDING_IDX = 1
CLS_IDX = 0
LN_EPS = 1e-5
NEG_INF = -1e9                   # stands in for masked_fill(-inf); exp underflows to 0
LOGIT_PAD = 128                  # lane-dense padded width for the scalar regressor output


# ------------------------------ the fused kernel --------------------------------
def _fused_forward_kernel(
    x_ref, bias_ref, cos_ref, sin_ref, rot_ref,
    ln1g_ref, ln1b_ref, wqkv_ref, bqkv_ref, wo_ref, bo_ref,
    ln2g_ref, ln2b_ref, w1_ref, b1_ref, w2_ref, b2_ref,
    lnfg_ref, lnfb_ref, rw1_ref, rb1_ref, rw2_ref, rb2_ref,
    o_ref,
    *, num_layers, num_heads, head_dim, eps):
  E = x_ref.shape[2]
  H, D = num_heads, head_dim

  def layer_norm(h, g, b):
    mu = jnp.mean(h, axis=-1, keepdims=True)
    hc = h - mu
    var = jnp.mean(hc * hc, axis=-1, keepdims=True)
    return hc * jax.lax.rsqrt(var + eps) * g + b

  def gelu(h):
    # tanh GELU approximation (pure VPU/EUP work; no reliance on an erf lowering).
    c = math.sqrt(2.0 / math.pi)
    return 0.5 * h * (1.0 + jnp.tanh(c * (h + 0.044715 * h * h * h)))

  x = x_ref[0]                 # (T, E) activations, VMEM/vreg-resident values
  bias = bias_ref[0]           # (1, T) additive key-padding bias
  cos = cos_ref[...]           # (T, E) RoPE cos, tiled per head
  sin = sin_ref[...]           # (T, E) RoPE sin, tiled per head
  rot = rot_ref[...]           # (E, E) block-diag signed perm: z @ rot == rotate_half(z) per head

  def rope(z):
    return z * cos + jnp.dot(z, rot, preferred_element_type=jnp.float32) * sin

  for l in range(num_layers):
    # ------------- self-attention block (pre-LN, RoPE, fused QKV) -------------
    h = layer_norm(x, ln1g_ref[l], ln1b_ref[l])
    qkv = jnp.dot(h, wqkv_ref[l], preferred_element_type=jnp.float32) + bqkv_ref[l]  # (T, 3E)
    q = rope(qkv[:, 0:E])                                # scale already folded into Wq/bq
    k = rope(qkv[:, E:2 * E])
    v = qkv[:, 2 * E:3 * E]

    heads = []
    for hd in range(H):                                  # all heads inside one grid step
      lo = hd * D
      q_h = q[:, lo:lo + D]                              # (T, D)
      k_h = k[:, lo:lo + D]
      v_h = v[:, lo:lo + D]
      s = jax.lax.dot_general(q_h, k_h, (((1,), (1,)), ((), ())),
                              preferred_element_type=jnp.float32)   # (T, T)
      s = s + bias                                       # key-padding bias over keys
      m = jnp.max(s, axis=-1, keepdims=True)
      p = jnp.exp(s - m)
      p = p * pl.reciprocal(jnp.sum(p, axis=-1, keepdims=True), approx=True)
      heads.append(jnp.dot(p, v_h, preferred_element_type=jnp.float32))   # (T, D)

    attn = jnp.concatenate(heads, axis=-1)               # (T, E) merged heads
    x = x + jnp.dot(attn, wo_ref[l], preferred_element_type=jnp.float32) + bo_ref[l]

    # ------------------- feed-forward block (pre-LN, GELU) --------------------
    h = layer_norm(x, ln2g_ref[l], ln2b_ref[l])
    h = gelu(jnp.dot(h, w1_ref[l], preferred_element_type=jnp.float32) + b1_ref[l])
    x = x + jnp.dot(h, w2_ref[l], preferred_element_type=jnp.float32) + b2_ref[l]

  # final LN + regressor; only the CLS row (position 0) feeds the regressor, and
  # layer norm is per-row, so normalizing just that row is exact.
  cls = layer_norm(x[0:1, :], lnfg_ref[...], lnfb_ref[...])                  # (1, E)
  r = gelu(jnp.dot(cls, rw1_ref[...], preferred_element_type=jnp.float32) + rb1_ref[...])
  o_ref[0] = (jnp.dot(r, rw2_ref[...], preferred_element_type=jnp.float32)
              + rb2_ref[...])                            # (1, 128); only lane 0 is the logit


# ------------------------------ parameters & glue --------------------------------
def init_params(key):
  keys = jax.random.split(key, NUM_LAYERS + 2)

  def dense(k, fan_in, fan_out):
    kw, kb = jax.random.split(k)
    w = jax.random.normal(kw, (fan_in, fan_out), jnp.float32) * 0.02
    b = jax.random.normal(kb, (1, fan_out), jnp.float32) * 0.02
    return w, b

  emb = jax.random.normal(keys[0], (ALPHABET_SIZE, EMBED_DIM), jnp.float32) * 0.02
  emb = emb.at[PADDING_IDX].set(0.0)     # nn.Embedding(padding_idx=...) zeroes this row

  scale = float(HEAD_DIM) ** -0.5
  ln1g, ln1b, ln2g, ln2b = [], [], [], []
  wqkv, bqkv, wo, bo, w1, b1, w2, b2 = [], [], [], [], [], [], [], []
  for l in range(NUM_LAYERS):
    lk = jax.random.split(keys[1 + l], 6)
    wq, bq = dense(lk[0], EMBED_DIM, EMBED_DIM)
    wk, bk = dense(lk[1], EMBED_DIM, EMBED_DIM)
    wv, bv = dense(lk[2], EMBED_DIM, EMBED_DIM)
    wo_l, bo_l = dense(lk[3], EMBED_DIM, EMBED_DIM)
    w1_l, b1_l = dense(lk[4], EMBED_DIM, FFN_DIM)
    w2_l, b2_l = dense(lk[5], FFN_DIM, EMBED_DIM)
    # fuse Q|K|V into one (E, 3E) projection; fold the attention scale into Wq/bq
    wqkv.append(jnp.concatenate([wq * scale, wk, wv], axis=1))
    bqkv.append(jnp.concatenate([bq * scale, bk, bv], axis=1))
    wo.append(wo_l); bo.append(bo_l)
    w1.append(w1_l); b1.append(b1_l)
    w2.append(w2_l); b2.append(b2_l)
    ln1g.append(jnp.ones((1, EMBED_DIM), jnp.float32))
    ln1b.append(jnp.zeros((1, EMBED_DIM), jnp.float32))
    ln2g.append(jnp.ones((1, EMBED_DIM), jnp.float32))
    ln2b.append(jnp.zeros((1, EMBED_DIM), jnp.float32))

  rk = jax.random.split(keys[1 + NUM_LAYERS], 2)
  rw1, rb1 = dense(rk[0], EMBED_DIM, EMBED_DIM // 2)
  rw2, rb2 = dense(rk[1], EMBED_DIM // 2, 1)
  # zero-pad the final (E//2, 1) projection to 128 lanes so the kernel's single
  # output store is lane-dense; only column 0 is meaningful.
  rw2p = jnp.zeros((EMBED_DIM // 2, LOGIT_PAD), jnp.float32).at[:, :1].set(rw2)
  rb2p = jnp.zeros((1, LOGIT_PAD), jnp.float32).at[:, :1].set(rb2)

  return dict(
      embed=emb,
      ln1_g=jnp.stack(ln1g), ln1_b=jnp.stack(ln1b),
      ln2_g=jnp.stack(ln2g), ln2_b=jnp.stack(ln2b),
      wqkv=jnp.stack(wqkv), bqkv=jnp.stack(bqkv),
      wo=jnp.stack(wo), bo=jnp.stack(bo),
      w1=jnp.stack(w1), b1=jnp.stack(b1),
      w2=jnp.stack(w2), b2=jnp.stack(b2),
      lnf_g=jnp.ones((1, EMBED_DIM), jnp.float32),
      lnf_b=jnp.zeros((1, EMBED_DIM), jnp.float32),
      rw1=rw1, rb1=rb1, rw2=rw2p, rb2=rb2p)


def rope_tables(T, d, H):
  inv_freq = 1.0 / (10000.0 ** (jnp.arange(0, d, 2, dtype=jnp.float32) / d))
  t = jnp.arange(T, dtype=jnp.float32)
  freqs = jnp.outer(t, inv_freq)                       # (T, d//2)
  emb = jnp.concatenate([freqs, freqs], axis=-1)       # (T, d)
  d2 = d // 2
  # rotate_half(x) = concat(-x[d/2:], x[:d/2]) expressed as x @ rot_head
  rot_head = jnp.zeros((d, d), jnp.float32)
  rot_head = rot_head.at[d2:, :d2].set(-jnp.eye(d2, dtype=jnp.float32))
  rot_head = rot_head.at[:d2, d2:].set(jnp.eye(d2, dtype=jnp.float32))
  rot = jnp.kron(jnp.eye(H, dtype=jnp.float32), rot_head)   # (H*d, H*d) block-diagonal
  cos = jnp.tile(jnp.cos(emb), (1, H))                 # (T, H*d)
  sin = jnp.tile(jnp.sin(emb), (1, H))
  return cos, sin, rot


def protein_bert_regressor_forward(params, tokens):
  B, T = tokens.shape
  E, H, D, L, F = EMBED_DIM, NUM_HEADS, HEAD_DIM, NUM_LAYERS, FFN_DIM

  padding_mask = (tokens == PADDING_IDX)                         # (B, T) bool
  # TODO(synk): token-embedding gather stays in plain JAX (data-dependent row gather).
  x = params["embed"][tokens].astype(jnp.float32)                # embed_scale == 1, rope => no pos-emb
  x = x * (1.0 - padding_mask[..., None].astype(x.dtype))        # zero pad positions
  bias = jnp.where(padding_mask, NEG_INF, 0.0).astype(jnp.float32).reshape(B, 1, T)
  cos, sin, rot = rope_tables(T, D, H)

  p = params
  out = pl.pallas_call(
      functools.partial(_fused_forward_kernel,
                        num_layers=L, num_heads=H, head_dim=D, eps=LN_EPS),
      grid=(B,),
      in_specs=[
          pl.BlockSpec((1, T, E), lambda b: (b, 0, 0)),          # x (per-batch block)
          pl.BlockSpec((1, 1, T), lambda b: (b, 0, 0)),          # key-padding bias
          pl.BlockSpec((T, E), lambda b: (0, 0)),                # cos
          pl.BlockSpec((T, E), lambda b: (0, 0)),                # sin
          pl.BlockSpec((E, E), lambda b: (0, 0)),                # rotate_half matrix
          pl.BlockSpec((L, 1, E), lambda b: (0, 0, 0)),          # ln1 gamma
          pl.BlockSpec((L, 1, E), lambda b: (0, 0, 0)),          # ln1 beta
          pl.BlockSpec((L, E, 3 * E), lambda b: (0, 0, 0)),      # fused W_qkv
          pl.BlockSpec((L, 1, 3 * E), lambda b: (0, 0, 0)),      # fused b_qkv
          pl.BlockSpec((L, E, E), lambda b: (0, 0, 0)),          # W_o
          pl.BlockSpec((L, 1, E), lambda b: (0, 0, 0)),          # b_o
          pl.BlockSpec((L, 1, E), lambda b: (0, 0, 0)),          # ln2 gamma
          pl.BlockSpec((L, 1, E), lambda b: (0, 0, 0)),          # ln2 beta
          pl.BlockSpec((L, E, F), lambda b: (0, 0, 0)),          # W_1
          pl.BlockSpec((L, 1, F), lambda b: (0, 0, 0)),          # b_1
          pl.BlockSpec((L, F, E), lambda b: (0, 0, 0)),          # W_2
          pl.BlockSpec((L, 1, E), lambda b: (0, 0, 0)),          # b_2
          pl.BlockSpec((1, E), lambda b: (0, 0)),                # final LN gamma
          pl.BlockSpec((1, E), lambda b: (0, 0)),                # final LN beta
          pl.BlockSpec((E, E // 2), lambda b: (0, 0)),           # regressor W1
          pl.BlockSpec((1, E // 2), lambda b: (0, 0)),           # regressor b1
          pl.BlockSpec((E // 2, LOGIT_PAD), lambda b: (0, 0)),   # regressor W2 (lane-padded)
          pl.BlockSpec((1, LOGIT_PAD), lambda b: (0, 0)),        # regressor b2 (lane-padded)
      ],
      out_specs=pl.BlockSpec((1, 1, LOGIT_PAD), lambda b: (b, 0, 0)),
      out_shape=jax.ShapeDtypeStruct((B, 1, LOGIT_PAD), jnp.float32),
      compiler_params=pltpu.CompilerParams(dimension_semantics=("parallel",)),
  )(x, bias, cos, sin, rot,
    p["ln1_g"], p["ln1_b"], p["wqkv"], p["bqkv"], p["wo"], p["bo"],
    p["ln2_g"], p["ln2_b"], p["w1"], p["b1"], p["w2"], p["b2"],
    p["lnf_g"], p["lnf_b"], p["rw1"], p["rb1"], p["rw2"], p["rb2"])

  logits = out[:, 0, :1]                                          # (B, 1): lane 0 holds the logit
  return {"logits": logits, "representations": {}}                # repr_layers=[] default


# ------------------------------------- main --------------------------------------
if __name__ == "__main__":
  key = jax.random.PRNGKey(0)
  pkey, tkey = jax.random.split(key)
  params = init_params(pkey)

  B, T = 2, 8
  tokens = jax.random.randint(tkey, (B, T), minval=4, maxval=ALPHABET_SIZE, dtype=jnp.int32)
  tokens = tokens.at[:, 0].set(CLS_IDX)            # prepend_bos / cls token
  tokens = tokens.at[1, T - 1].set(PADDING_IDX)    # one padded position to exercise masking

  out = protein_bert_regressor_forward(params, tokens)
  logits = jax.block_until_ready(out["logits"])
  assert logits.shape == (B, 1)
  assert bool(jnp.all(jnp.isfinite(logits)))
  print("KERNEL_OK")
</pallas_src>

<mosaic_0001>
module attributes {stable_mosaic.version = 11 : i64} {
  func.func @_fused_forward_kernel(%arg0: i32, %arg1: memref<1x8x32xf32, #tpu.memory_space<vmem>>, %arg2: memref<1x1x8xf32, #tpu.memory_space<vmem>>, %arg3: memref<8x32xf32, #tpu.memory_space<vmem>>, %arg4: memref<8x32xf32, #tpu.memory_space<vmem>>, %arg5: memref<32x32xf32, #tpu.memory_space<vmem>>, %arg6: memref<2x1x32xf32, #tpu.memory_space<vmem>>, %arg7: memref<2x1x32xf32, #tpu.memory_space<vmem>>, %arg8: memref<2x32x96xf32, #tpu.memory_space<vmem>>, %arg9: memref<2x1x96xf32, #tpu.memory_space<vmem>>, %arg10: memref<2x32x32xf32, #tpu.memory_space<vmem>>, %arg11: memref<2x1x32xf32, #tpu.memory_space<vmem>>, %arg12: memref<2x1x32xf32, #tpu.memory_space<vmem>>, %arg13: memref<2x1x32xf32, #tpu.memory_space<vmem>>, %arg14: memref<2x32x128xf32, #tpu.memory_space<vmem>>, %arg15: memref<2x1x128xf32, #tpu.memory_space<vmem>>, %arg16: memref<2x128x32xf32, #tpu.memory_space<vmem>>, %arg17: memref<2x1x32xf32, #tpu.memory_space<vmem>>, %arg18: memref<1x32xf32, #tpu.memory_space<vmem>>, %arg19: memref<1x32xf32, #tpu.memory_space<vmem>>, %arg20: memref<32x16xf32, #tpu.memory_space<vmem>>, %arg21: memref<1x16xf32, #tpu.memory_space<vmem>>, %arg22: memref<16x128xf32, #tpu.memory_space<vmem>>, %arg23: memref<1x128xf32, #tpu.memory_space<vmem>>, %arg24: memref<1x1x128xf32, #tpu.memory_space<vmem>>) attributes {dimension_semantics = [#tpu.dimension_semantics<parallel>], iteration_bounds = array<i64: 2>, scalar_prefetch = 0 : i64, scratch_operands = 0 : i64, tpu.core_type = #tpu.core_type<tc>, window_params = [{transform_indices = @transform_0, window_bounds = array<i64: 1, 8, 32>}, {transform_indices = @transform_1, window_bounds = array<i64: 1, 1, 8>}, {pipeline_mode = #tpu.pipeline_mode<synchronous>, transform_indices = @transform_2, window_bounds = array<i64: 8, 32>}, {pipeline_mode = #tpu.pipeline_mode<synchronous>, transform_indices = @transform_3, window_bounds = array<i64: 8, 32>}, {pipeline_mode = #tpu.pipeline_mode<synchronous>, transform_indices = @transform_4, window_bounds = array<i64: 32, 32>}, {pipeline_mode = #tpu.pipeline_mode<synchronous>, transform_indices = @transform_5, window_bounds = array<i64: 2, 1, 32>}, {pipeline_mode = #tpu.pipeline_mode<synchronous>, transform_indices = @transform_6, window_bounds = array<i64: 2, 1, 32>}, {pipeline_mode = #tpu.pipeline_mode<synchronous>, transform_indices = @transform_7, window_bounds = array<i64: 2, 32, 96>}, {pipeline_mode = #tpu.pipeline_mode<synchronous>, transform_indices = @transform_8, window_bounds = array<i64: 2, 1, 96>}, {pipeline_mode = #tpu.pipeline_mode<synchronous>, transform_indices = @transform_9, window_bounds = array<i64: 2, 32, 32>}, {pipeline_mode = #tpu.pipeline_mode<synchronous>, transform_indices = @transform_10, window_bounds = array<i64: 2, 1, 32>}, {pipeline_mode = #tpu.pipeline_mode<synchronous>, transform_indices = @transform_11, window_bounds = array<i64: 2, 1, 32>}, {pipeline_mode = #tpu.pipeline_mode<synchronous>, transform_indices = @transform_12, window_bounds = array<i64: 2, 1, 32>}, {pipeline_mode = #tpu.pipeline_mode<synchronous>, transform_indices = @transform_13, window_bounds = array<i64: 2, 32, 128>}, {pipeline_mode = #tpu.pipeline_mode<synchronous>, transform_indices = @transform_14, window_bounds = array<i64: 2, 1, 128>}, {pipeline_mode = #tpu.pipeline_mode<synchronous>, transform_indices = @transform_15, window_bounds = array<i64: 2, 128, 32>}, {pipeline_mode = #tpu.pipeline_mode<synchronous>, transform_indices = @transform_16, window_bounds = array<i64: 2, 1, 32>}, {pipeline_mode = #tpu.pipeline_mode<synchronous>, transform_indices = @transform_17, window_bounds = array<i64: 1, 32>}, {pipeline_mode = #tpu.pipeline_mode<synchronous>, transform_indices = @transform_18, window_bounds = array<i64: 1, 32>}, {pipeline_mode = #tpu.pipeline_mode<synchronous>, transform_indices = @transform_19, window_bounds = array<i64: 32, 16>}, {pipeline_mode = #tpu.pipeline_mode<synchronous>, transform_indices = @transform_20, window_bounds = array<i64: 1, 16>}, {pipeline_mode = #tpu.pipeline_mode<synchronous>, transform_indices = @transform_21, window_bounds = array<i64: 16, 128>}, {pipeline_mode = #tpu.pipeline_mode<synchronous>, transform_indices = @transform_22, window_bounds = array<i64: 1, 128>}, {transform_indices = @transform_23, window_bounds = array<i64: 1, 1, 128>}]} {
    %c0 = arith.constant 0 : index
    %c0_0 = arith.constant 0 : index
    %c0_1 = arith.constant 0 : index
    %0 = vector.load %arg1[%c0, %c0_0, %c0_1] : memref<1x8x32xf32, #tpu.memory_space<vmem>>, vector<1x8x32xf32>
    %1 = vector.shape_cast %0 : vector<1x8x32xf32> to vector<8x32xf32>
    %c0_2 = arith.constant 0 : index
    %c0_3 = arith.constant 0 : index
    %c0_4 = arith.constant 0 : index
    %2 = vector.load %arg2[%c0_2, %c0_3, %c0_4] : memref<1x1x8xf32, #tpu.memory_space<vmem>>, vector<1x1x8xf32>
    %3 = vector.shape_cast %2 : vector<1x1x8xf32> to vector<1x8xf32>
    %c0_5 = arith.constant 0 : index
    %c0_6 = arith.constant 0 : index
    %4 = vector.load %arg3[%c0_5, %c0_6] : memref<8x32xf32, #tpu.memory_space<vmem>>, vector<8x32xf32>
    %c0_7 = arith.constant 0 : index
    %c0_8 = arith.constant 0 : index
    %5 = vector.load %arg4[%c0_7, %c0_8] : memref<8x32xf32, #tpu.memory_space<vmem>>, vector<8x32xf32>
    %c0_9 = arith.constant 0 : index
    %c0_10 = arith.constant 0 : index
    %6 = vector.load %arg5[%c0_9, %c0_10] : memref<32x32xf32, #tpu.memory_space<vmem>>, vector<32x32xf32>
    %c0_11 = arith.constant 0 : index
    %c0_12 = arith.constant 0 : index
    %c0_13 = arith.constant 0 : index
    %7 = vector.load %arg6[%c0_11, %c0_12, %c0_13] : memref<2x1x32xf32, #tpu.memory_space<vmem>>, vector<1x1x32xf32>
    %8 = vector.shape_cast %7 : vector<1x1x32xf32> to vector<1x32xf32>
    %c0_14 = arith.constant 0 : index
    %c0_15 = arith.constant 0 : index
    %c0_16 = arith.constant 0 : index
    %9 = vector.load %arg7[%c0_14, %c0_15, %c0_16] : memref<2x1x32xf32, #tpu.memory_space<vmem>>, vector<1x1x32xf32>
    %10 = vector.shape_cast %9 : vector<1x1x32xf32> to vector<1x32xf32>
    %cst = arith.constant dense<0.000000e+00> : vector<8xf32>
    %11 = vector.multi_reduction <add>, %1, %cst [1] : vector<8x32xf32> to vector<8xf32>
    %12 = vector.shape_cast %11 : vector<8xf32> to vector<8x1xf32>
    %cst_17 = arith.constant 3.200000e+01 : f32
    %13 = vector.broadcast %cst_17 : f32 to vector<8x1xf32>
    %14 = arith.divf %12, %13 : vector<8x1xf32>
    %15 = vector.broadcast %14 : vector<8x1xf32> to vector<8x32xf32>
    %16 = arith.subf %1, %15 : vector<8x32xf32>
    %17 = arith.mulf %16, %16 : vector<8x32xf32>
    %cst_18 = arith.constant dense<0.000000e+00> : vector<8xf32>
    %18 = vector.multi_reduction <add>, %17, %cst_18 [1] : vector<8x32xf32> to vector<8xf32>
    %19 = vector.shape_cast %18 : vector<8xf32> to vector<8x1xf32>
    %cst_19 = arith.constant 3.200000e+01 : f32
    %20 = vector.broadcast %cst_19 : f32 to vector<8x1xf32>
    %21 = arith.divf %19, %20 : vector<8x1xf32>
    %cst_20 = arith.constant 9.99999974E-6 : f32
    %22 = vector.broadcast %cst_20 : f32 to vector<8x1xf32>
    %23 = arith.addf %21, %22 : vector<8x1xf32>
    %24 = math.rsqrt %23 : vector<8x1xf32>
    %25 = vector.broadcast %24 : vector<8x1xf32> to vector<8x32xf32>
    %26 = arith.mulf %16, %25 : vector<8x32xf32>
    %27 = vector.broadcast %8 : vector<1x32xf32> to vector<8x32xf32>
    %28 = arith.mulf %26, %27 : vector<8x32xf32>
    %29 = vector.broadcast %10 : vector<1x32xf32> to vector<8x32xf32>
    %30 = arith.addf %28, %29 : vector<8x32xf32>
    %c0_21 = arith.constant 0 : index
    %c0_22 = arith.constant 0 : index
    %c0_23 = arith.constant 0 : index
    %31 = vector.load %arg8[%c0_21, %c0_22, %c0_23] : memref<2x32x96xf32, #tpu.memory_space<vmem>>, vector<1x32x96xf32>
    %32 = vector.shape_cast %31 : vector<1x32x96xf32> to vector<32x96xf32>
    %cst_24 = arith.constant dense<0.000000e+00> : vector<8x96xf32>
    %33 = tpu.matmul %30, %32, %cst_24 {dimension_numbers = #tpu.dot_dimension_numbers<[1], [0], [0], [1], [0, 0, 1, 1], [], []>} : vector<8x32xf32>, vector<32x96xf32>, vector<8x96xf32> -> vector<8x96xf32>
    %c0_25 = arith.constant 0 : index
    %c0_26 = arith.constant 0 : index
    %c0_27 = arith.constant 0 : index
    %34 = vector.load %arg9[%c0_25, %c0_26, %c0_27] : memref<2x1x96xf32, #tpu.memory_space<vmem>>, vector<1x1x96xf32>
    %35 = vector.shape_cast %34 : vector<1x1x96xf32> to vector<1x96xf32>
    %36 = vector.broadcast %35 : vector<1x96xf32> to vector<8x96xf32>
    %37 = arith.addf %33, %36 : vector<8x96xf32>
    %38 = vector.extract_strided_slice %37 {offsets = [0, 0], sizes = [8, 32], strides = [1, 1]} : vector<8x96xf32> to vector<8x32xf32>
    %39 = arith.mulf %38, %4 : vector<8x32xf32>
    %cst_28 = arith.constant dense<0.000000e+00> : vector<8x32xf32>
    %40 = tpu.matmul %38, %6, %cst_28 {dimension_numbers = #tpu.dot_dimension_numbers<[1], [0], [0], [1], [0, 0, 1, 1], [], []>} : vector<8x32xf32>, vector<32x32xf32>, vector<8x32xf32> -> vector<8x32xf32>
    %41 = arith.mulf %40, %5 : vector<8x32xf32>
    %42 = arith.addf %39, %41 : vector<8x32xf32>
    %43 = vector.extract_strided_slice %37 {offsets = [0, 32], sizes = [8, 32], strides = [1, 1]} : vector<8x96xf32> to vector<8x32xf32>
    %44 = arith.mulf %43, %4 : vector<8x32xf32>
    %cst_29 = arith.constant dense<0.000000e+00> : vector<8x32xf32>
    %45 = tpu.matmul %43, %6, %cst_29 {dimension_numbers = #tpu.dot_dimension_numbers<[1], [0], [0], [1], [0, 0, 1, 1], [], []>} : vector<8x32xf32>, vector<32x32xf32>, vector<8x32xf32> -> vector<8x32xf32>
    %46 = arith.mulf %45, %5 : vector<8x32xf32>
    %47 = arith.addf %44, %46 : vector<8x32xf32>
    %48 = vector.extract_strided_slice %37 {offsets = [0, 64], sizes = [8, 32], strides = [1, 1]} : vector<8x96xf32> to vector<8x32xf32>
    %49 = vector.extract_strided_slice %42 {offsets = [0, 0], sizes = [8, 8], strides = [1, 1]} : vector<8x32xf32> to vector<8x8xf32>
    %50 = vector.extract_strided_slice %47 {offsets = [0, 0], sizes = [8, 8], strides = [1, 1]} : vector<8x32xf32> to vector<8x8xf32>
    %51 = vector.extract_strided_slice %48 {offsets = [0, 0], sizes = [8, 8], strides = [1, 1]} : vector<8x32xf32> to vector<8x8xf32>
    %cst_30 = arith.constant dense<0.000000e+00> : vector<8x8xf32>
    %52 = tpu.matmul %49, %50, %cst_30 {dimension_numbers = #tpu.dot_dimension_numbers<[1], [1], [0], [0], [0, 0, 1, 0], [], []>} : vector<8x8xf32>, vector<8x8xf32>, vector<8x8xf32> -> vector<8x8xf32>
    %53 = vector.broadcast %3 : vector<1x8xf32> to vector<8x8xf32>
    %54 = arith.addf %52, %53 : vector<8x8xf32>
    %cst_31 = arith.constant dense<0xFF800000> : vector<8xf32>
    %55 = vector.multi_reduction <maximumf>, %54, %cst_31 [1] : vector<8x8xf32> to vector<8xf32>
    %56 = vector.shape_cast %55 : vector<8xf32> to vector<8x1xf32>
    %57 = vector.broadcast %56 : vector<8x1xf32> to vector<8x8xf32>
    %58 = arith.subf %54, %57 : vector<8x8xf32>
    %59 = math.exp %58 : vector<8x8xf32>
    %cst_32 = arith.constant dense<0.000000e+00> : vector<8xf32>
    %60 = vector.multi_reduction <add>, %59, %cst_32 [1] : vector<8x8xf32> to vector<8xf32>
    %61 = vector.shape_cast %60 : vector<8xf32> to vector<8x1xf32>
    %62 = tpu.reciprocal %61 {approx = true} : vector<8x1xf32> -> vector<8x1xf32>
    %63 = vector.broadcast %62 : vector<8x1xf32> to vector<8x8xf32>
    %64 = arith.mulf %59, %63 : vector<8x8xf32>
    %cst_33 = arith.constant dense<0.000000e+00> : vector<8x8xf32>
    %65 = tpu.matmul %64, %51, %cst_33 {dimension_numbers = #tpu.dot_dimension_numbers<[1], [0], [0], [1], [0, 0, 1, 1], [], []>} : vector<8x8xf32>, vector<8x8xf32>, vector<8x8xf32> -> vector<8x8xf32>
    %66 = vector.extract_strided_slice %42 {offsets = [0, 8], sizes = [8, 8], strides = [1, 1]} : vector<8x32xf32> to vector<8x8xf32>
    %67 = vector.extract_strided_slice %47 {offsets = [0, 8], sizes = [8, 8], strides = [1, 1]} : vector<8x32xf32> to vector<8x8xf32>
    %68 = vector.extract_strided_slice %48 {offsets = [0, 8], sizes = [8, 8], strides = [1, 1]} : vector<8x32xf32> to vector<8x8xf32>
    %cst_34 = arith.constant dense<0.000000e+00> : vector<8x8xf32>
    %69 = tpu.matmul %66, %67, %cst_34 {dimension_numbers = #tpu.dot_dimension_numbers<[1], [1], [0], [0], [0, 0, 1, 0], [], []>} : vector<8x8xf32>, vector<8x8xf32>, vector<8x8xf32> -> vector<8x8xf32>
    %70 = vector.broadcast %3 : vector<1x8xf32> to vector<8x8xf32>
    %71 = arith.addf %69, %70 : vector<8x8xf32>
    %cst_35 = arith.constant dense<0xFF800000> : vector<8xf32>
    %72 = vector.multi_reduction <maximumf>, %71, %cst_35 [1] : vector<8x8xf32> to vector<8xf32>
    %73 = vector.shape_cast %72 : vector<8xf32> to vector<8x1xf32>
    %74 = vector.broadcast %73 : vector<8x1xf32> to vector<8x8xf32>
    %75 = arith.subf %71, %74 : vector<8x8xf32>
    %76 = math.exp %75 : vector<8x8xf32>
    %cst_36 = arith.constant dense<0.000000e+00> : vector<8xf32>
    %77 = vector.multi_reduction <add>, %76, %cst_36 [1] : vector<8x8xf32> to vector<8xf32>
    %78 = vector.shape_cast %77 : vector<8xf32> to vector<8x1xf32>
    %79 = tpu.reciprocal %78 {approx = true} : vector<8x1xf32> -> vector<8x1xf32>
    %80 = vector.broadcast %79 : vector<8x1xf32> to vector<8x8xf32>
    %81 = arith.mulf %76, %80 : vector<8x8xf32>
    %cst_37 = arith.constant dense<0.000000e+00> : vector<8x8xf32>
    %82 = tpu.matmul %81, %68, %cst_37 {dimension_numbers = #tpu.dot_dimension_numbers<[1], [0], [0], [1], [0, 0, 1, 1], [], []>} : vector<8x8xf32>, vector<8x8xf32>, vector<8x8xf32> -> vector<8x8xf32>
    %83 = vector.extract_strided_slice %42 {offsets = [0, 16], sizes = [8, 8], strides = [1, 1]} : vector<8x32xf32> to vector<8x8xf32>
    %84 = vector.extract_strided_slice %47 {offsets = [0, 16], sizes = [8, 8], strides = [1, 1]} : vector<8x32xf32> to vector<8x8xf32>
    %85 = vector.extract_strided_slice %48 {offsets = [0, 16], sizes = [8, 8], strides = [1, 1]} : vector<8x32xf32> to vector<8x8xf32>
    %cst_38 = arith.constant dense<0.000000e+00> : vector<8x8xf32>
    %86 = tpu.matmul %83, %84, %cst_38 {dimension_numbers = #tpu.dot_dimension_numbers<[1], [1], [0], [0], [0, 0, 1, 0], [], []>} : vector<8x8xf32>, vector<8x8xf32>, vector<8x8xf32> -> vector<8x8xf32>
    %87 = vector.broadcast %3 : vector<1x8xf32> to vector<8x8xf32>
    %88 = arith.addf %86, %87 : vector<8x8xf32>
    %cst_39 = arith.constant dense<0xFF800000> : vector<8xf32>
    %89 = vector.multi_reduction <maximumf>, %88, %cst_39 [1] : vector<8x8xf32> to vector<8xf32>
    %90 = vector.shape_cast %89 : vector<8xf32> to vector<8x1xf32>
    %91 = vector.broadcast %90 : vector<8x1xf32> to vector<8x8xf32>
    %92 = arith.subf %88, %91 : vector<8x8xf32>
    %93 = math.exp %92 : vector<8x8xf32>
    %cst_40 = arith.constant dense<0.000000e+00> : vector<8xf32>
    %94 = vector.multi_reduction <add>, %93, %cst_40 [1] : vector<8x8xf32> to vector<8xf32>
    %95 = vector.shape_cast %94 : vector<8xf32> to vector<8x1xf32>
    %96 = tpu.reciprocal %95 {approx = true} : vector<8x1xf32> -> vector<8x1xf32>
    %97 = vector.broadcast %96 : vector<8x1xf32> to vector<8x8xf32>
    %98 = arith.mulf %93, %97 : vector<8x8xf32>
    %cst_41 = arith.constant dense<0.000000e+00> : vector<8x8xf32>
    %99 = tpu.matmul %98, %85, %cst_41 {dimension_numbers = #tpu.dot_dimension_numbers<[1], [0], [0], [1], [0, 0, 1, 1], [], []>} : vector<8x8xf32>, vector<8x8xf32>, vector<8x8xf32> -> vector<8x8xf32>
    %100 = vector.extract_strided_slice %42 {offsets = [0, 24], sizes = [8, 8], strides = [1, 1]} : vector<8x32xf32> to vector<8x8xf32>
    %101 = vector.extract_strided_slice %47 {offsets = [0, 24], sizes = [8, 8], strides = [1, 1]} : vector<8x32xf32> to vector<8x8xf32>
    %102 = vector.extract_strided_slice %48 {offsets = [0, 24], sizes = [8, 8], strides = [1, 1]} : vector<8x32xf32> to vector<8x8xf32>
    %cst_42 = arith.constant dense<0.000000e+00> : vector<8x8xf32>
    %103 = tpu.matmul %100, %101, %cst_42 {dimension_numbers = #tpu.dot_dimension_numbers<[1], [1], [0], [0], [0, 0, 1, 0], [], []>} : vector<8x8xf32>, vector<8x8xf32>, vector<8x8xf32> -> vector<8x8xf32>
    %104 = vector.broadcast %3 : vector<1x8xf32> to vector<8x8xf32>
    %105 = arith.addf %103, %104 : vector<8x8xf32>
    %cst_43 = arith.constant dense<0xFF800000> : vector<8xf32>
    %106 = vector.multi_reduction <maximumf>, %105, %cst_43 [1] : vector<8x8xf32> to vector<8xf32>
    %107 = vector.shape_cast %106 : vector<8xf32> to vector<8x1xf32>
    %108 = vector.broadcast %107 : vector<8x1xf32> to vector<8x8xf32>
    %109 = arith.subf %105, %108 : vector<8x8xf32>
    %110 = math.exp %109 : vector<8x8xf32>
    %cst_44 = arith.constant dense<0.000000e+00> : vector<8xf32>
    %111 = vector.multi_reduction <add>, %110, %cst_44 [1] : vector<8x8xf32> to vector<8xf32>
    %112 = vector.shape_cast %111 : vector<8xf32> to vector<8x1xf32>
    %113 = tpu.reciprocal %112 {approx = true} : vector<8x1xf32> -> vector<8x1xf32>
    %114 = vector.broadcast %113 : vector<8x1xf32> to vector<8x8xf32>
    %115 = arith.mulf %110, %114 : vector<8x8xf32>
    %cst_45 = arith.constant dense<0.000000e+00> : vector<8x8xf32>
    %116 = tpu.matmul %115, %102, %cst_45 {dimension_numbers = #tpu.dot_dimension_numbers<[1], [0], [0], [1], [0, 0, 1, 1], [], []>} : vector<8x8xf32>, vector<8x8xf32>, vector<8x8xf32> -> vector<8x8xf32>
    %117 = tpu.concatenate %65, %82, %99, %116 in 1 : vector<8x8xf32>, vector<8x8xf32>, vector<8x8xf32>, vector<8x8xf32> -> vector<8x32xf32>
    %c0_46 = arith.constant 0 : index
    %c0_47 = arith.constant 0 : index
    %c0_48 = arith.constant 0 : index
    %118 = vector.load %arg10[%c0_46, %c0_47, %c0_48] : memref<2x32x32xf32, #tpu.memory_space<vmem>>, vector<1x32x32xf32>
    %119 = vector.shape_cast %118 : vector<1x32x32xf32> to vector<32x32xf32>
    %cst_49 = arith.constant dense<0.000000e+00> : vector<8x32xf32>
    %120 = tpu.matmul %117, %119, %cst_49 {dimension_numbers = #tpu.dot_dimension_numbers<[1], [0], [0], [1], [0, 0, 1, 1], [], []>} : vector<8x32xf32>, vector<32x32xf32>, vector<8x32xf32> -> vector<8x32xf32>
    %121 = arith.addf %1, %120 : vector<8x32xf32>
    %c0_50 = arith.constant 0 : index
    %c0_51 = arith.constant 0 : index
    %c0_52 = arith.constant 0 : index
    %122 = vector.load %arg11[%c0_50, %c0_51, %c0_52] : memref<2x1x32xf32, #tpu.memory_space<vmem>>, vector<1x1x32xf32>
    %123 = vector.shape_cast %122 : vector<1x1x32xf32> to vector<1x32xf32>
    %124 = vector.broadcast %123 : vector<1x32xf32> to vector<8x32xf32>
    %125 = arith.addf %121, %124 : vector<8x32xf32>
    %c0_53 = arith.constant 0 : index
    %c0_54 = arith.constant 0 : index
    %c0_55 = arith.constant 0 : index
    %126 = vector.load %arg12[%c0_53, %c0_54, %c0_55] : memref<2x1x32xf32, #tpu.memory_space<vmem>>, vector<1x1x32xf32>
    %127 = vector.shape_cast %126 : vector<1x1x32xf32> to vector<1x32xf32>
    %c0_56 = arith.constant 0 : index
    %c0_57 = arith.constant 0 : index
    %c0_58 = arith.constant 0 : index
    %128 = vector.load %arg13[%c0_56, %c0_57, %c0_58] : memref<2x1x32xf32, #tpu.memory_space<vmem>>, vector<1x1x32xf32>
    %129 = vector.shape_cast %128 : vector<1x1x32xf32> to vector<1x32xf32>
    %cst_59 = arith.constant dense<0.000000e+00> : vector<8xf32>
    %130 = vector.multi_reduction <add>, %125, %cst_59 [1] : vector<8x32xf32> to vector<8xf32>
    %131 = vector.shape_cast %130 : vector<8xf32> to vector<8x1xf32>
    %cst_60 = arith.constant 3.200000e+01 : f32
    %132 = vector.broadcast %cst_60 : f32 to vector<8x1xf32>
    %133 = arith.divf %131, %132 : vector<8x1xf32>
    %134 = vector.broadcast %133 : vector<8x1xf32> to vector<8x32xf32>
    %135 = arith.subf %125, %134 : vector<8x32xf32>
    %136 = arith.mulf %135, %135 : vector<8x32xf32>
    %cst_61 = arith.constant dense<0.000000e+00> : vector<8xf32>
    %137 = vector.multi_reduction <add>, %136, %cst_61 [1] : vector<8x32xf32> to vector<8xf32>
    %138 = vector.shape_cast %137 : vector<8xf32> to vector<8x1xf32>
    %cst_62 = arith.constant 3.200000e+01 : f32
    %139 = vector.broadcast %cst_62 : f32 to vector<8x1xf32>
    %140 = arith.divf %138, %139 : vector<8x1xf32>
    %cst_63 = arith.constant 9.99999974E-6 : f32
    %141 = vector.broadcast %cst_63 : f32 to vector<8x1xf32>
    %142 = arith.addf %140, %141 : vector<8x1xf32>
    %143 = math.rsqrt %142 : vector<8x1xf32>
    %144 = vector.broadcast %143 : vector<8x1xf32> to vector<8x32xf32>
    %145 = arith.mulf %135, %144 : vector<8x32xf32>
    %146 = vector.broadcast %127 : vector<1x32xf32> to vector<8x32xf32>
    %147 = arith.mulf %145, %146 : vector<8x32xf32>
    %148 = vector.broadcast %129 : vector<1x32xf32> to vector<8x32xf32>
    %149 = arith.addf %147, %148 : vector<8x32xf32>
    %c0_64 = arith.constant 0 : index
    %c0_65 = arith.constant 0 : index
    %c0_66 = arith.constant 0 : index
    %150 = vector.load %arg14[%c0_64, %c0_65, %c0_66] : memref<2x32x128xf32, #tpu.memory_space<vmem>>, vector<1x32x128xf32>
    %151 = vector.shape_cast %150 : vector<1x32x128xf32> to vector<32x128xf32>
    %cst_67 = arith.constant dense<0.000000e+00> : vector<8x128xf32>
    %152 = tpu.matmul %149, %151, %cst_67 {dimension_numbers = #tpu.dot_dimension_numbers<[1], [0], [0], [1], [0, 0, 1, 1], [], []>} : vector<8x32xf32>, vector<32x128xf32>, vector<8x128xf32> -> vector<8x128xf32>
    %c0_68 = arith.constant 0 : index
    %c0_69 = arith.constant 0 : index
    %c0_70 = arith.constant 0 : index
    %153 = vector.load %arg15[%c0_68, %c0_69, %c0_70] : memref<2x1x128xf32, #tpu.memory_space<vmem>>, vector<1x1x128xf32>
    %154 = vector.shape_cast %153 : vector<1x1x128xf32> to vector<1x128xf32>
    %155 = vector.broadcast %154 : vector<1x128xf32> to vector<8x128xf32>
    %156 = arith.addf %152, %155 : vector<8x128xf32>
    %cst_71 = arith.constant 5.000000e-01 : f32
    %157 = vector.broadcast %cst_71 : f32 to vector<8x128xf32>
    %158 = arith.mulf %157, %156 : vector<8x128xf32>
    %cst_72 = arith.constant 4.471500e-02 : f32
    %159 = vector.broadcast %cst_72 : f32 to vector<8x128xf32>
    %160 = arith.mulf %159, %156 : vector<8x128xf32>
    %161 = arith.mulf %160, %156 : vector<8x128xf32>
    %162 = arith.mulf %161, %156 : vector<8x128xf32>
    %163 = arith.addf %156, %162 : vector<8x128xf32>
    %cst_73 = arith.constant 0.797884583 : f32
    %164 = vector.broadcast %cst_73 : f32 to vector<8x128xf32>
    %165 = arith.mulf %164, %163 : vector<8x128xf32>
    %166 = math.tanh %165 : vector<8x128xf32>
    %cst_74 = arith.constant 1.000000e+00 : f32
    %167 = vector.broadcast %cst_74 : f32 to vector<8x128xf32>
    %168 = arith.addf %167, %166 : vector<8x128xf32>
    %169 = arith.mulf %158, %168 : vector<8x128xf32>
    %c0_75 = arith.constant 0 : index
    %c0_76 = arith.constant 0 : index
    %c0_77 = arith.constant 0 : index
    %170 = vector.load %arg16[%c0_75, %c0_76, %c0_77] : memref<2x128x32xf32, #tpu.memory_space<vmem>>, vector<1x128x32xf32>
    %171 = vector.shape_cast %170 : vector<1x128x32xf32> to vector<128x32xf32>
    %cst_78 = arith.constant dense<0.000000e+00> : vector<8x32xf32>
    %172 = tpu.matmul %169, %171, %cst_78 {dimension_numbers = #tpu.dot_dimension_numbers<[1], [0], [0], [1], [0, 0, 1, 1], [], []>} : vector<8x128xf32>, vector<128x32xf32>, vector<8x32xf32> -> vector<8x32xf32>
    %173 = arith.addf %125, %172 : vector<8x32xf32>
    %c0_79 = arith.constant 0 : index
    %c0_80 = arith.constant 0 : index
    %c0_81 = arith.constant 0 : index
    %174 = vector.load %arg17[%c0_79, %c0_80, %c0_81] : memref<2x1x32xf32, #tpu.memory_space<vmem>>, vector<1x1x32xf32>
    %175 = vector.shape_cast %174 : vector<1x1x32xf32> to vector<1x32xf32>
    %176 = vector.broadcast %175 : vector<1x32xf32> to vector<8x32xf32>
    %177 = arith.addf %173, %176 : vector<8x32xf32>
    %c1 = arith.constant 1 : index
    %c0_82 = arith.constant 0 : index
    %c0_83 = arith.constant 0 : index
    %178 = vector.load %arg6[%c1, %c0_82, %c0_83] : memref<2x1x32xf32, #tpu.memory_space<vmem>>, vector<1x1x32xf32>
    %179 = vector.shape_cast %178 : vector<1x1x32xf32> to vector<1x32xf32>
    %c1_84 = arith.constant 1 : index
    %c0_85 = arith.constant 0 : index
    %c0_86 = arith.constant 0 : index
    %180 = vector.load %arg7[%c1_84, %c0_85, %c0_86] : memref<2x1x32xf32, #tpu.memory_space<vmem>>, vector<1x1x32xf32>
    %181 = vector.shape_cast %180 : vector<1x1x32xf32> to vector<1x32xf32>
    %cst_87 = arith.constant dense<0.000000e+00> : vector<8xf32>
    %182 = vector.multi_reduction <add>, %177, %cst_87 [1] : vector<8x32xf32> to vector<8xf32>
    %183 = vector.shape_cast %182 : vector<8xf32> to vector<8x1xf32>
    %cst_88 = arith.constant 3.200000e+01 : f32
    %184 = vector.broadcast %cst_88 : f32 to vector<8x1xf32>
    %185 = arith.divf %183, %184 : vector<8x1xf32>
    %186 = vector.broadcast %185 : vector<8x1xf32> to vector<8x32xf32>
    %187 = arith.subf %177, %186 : vector<8x32xf32>
    %188 = arith.mulf %187, %187 : vector<8x32xf32>
    %cst_89 = arith.constant dense<0.000000e+00> : vector<8xf32>
    %189 = vector.multi_reduction <add>, %188, %cst_89 [1] : vector<8x32xf32> to vector<8xf32>
    %190 = vector.shape_cast %189 : vector<8xf32> to vector<8x1xf32>
    %cst_90 = arith.constant 3.200000e+01 : f32
    %191 = vector.broadcast %cst_90 : f32 to vector<8x1xf32>
    %192 = arith.divf %190, %191 : vector<8x1xf32>
    %cst_91 = arith.constant 9.99999974E-6 : f32
    %193 = vector.broadcast %cst_91 : f32 to vector<8x1xf32>
    %194 = arith.addf %192, %193 : vector<8x1xf32>
    %195 = math.rsqrt %194 : vector<8x1xf32>
    %196 = vector.broadcast %195 : vector<8x1xf32> to vector<8x32xf32>
    %197 = arith.mulf %187, %196 : vector<8x32xf32>
    %198 = vector.broadcast %179 : vector<1x32xf32> to vector<8x32xf32>
    %199 = arith.mulf %197, %198 : vector<8x32xf32>
    %200 = vector.broadcast %181 : vector<1x32xf32> to vector<8x32xf32>
    %201 = arith.addf %199, %200 : vector<8x32xf32>
    %c1_92 = arith.constant 1 : index
    %c0_93 = arith.constant 0 : index
    %c0_94 = arith.constant 0 : index
    %202 = vector.load %arg8[%c1_92, %c0_93, %c0_94] : memref<2x32x96xf32, #tpu.memory_space<vmem>>, vector<1x32x96xf32>
    %203 = vector.shape_cast %202 : vector<1x32x96xf32> to vector<32x96xf32>
    %cst_95 = arith.constant dense<0.000000e+00> : vector<8x96xf32>
    %204 = tpu.matmul %201, %203, %cst_95 {dimension_numbers = #tpu.dot_dimension_numbers<[1], [0], [0], [1], [0, 0, 1, 1], [], []>} : vector<8x32xf32>, vector<32x96xf32>, vector<8x96xf32> -> vector<8x96xf32>
    %c1_96 = arith.constant 1 : index
    %c0_97 = arith.constant 0 : index
    %c0_98 = arith.constant 0 : index
    %205 = vector.load %arg9[%c1_96, %c0_97, %c0_98] : memref<2x1x96xf32, #tpu.memory_space<vmem>>, vector<1x1x96xf32>
    %206 = vector.shape_cast %205 : vector<1x1x96xf32> to vector<1x96xf32>
    %207 = vector.broadcast %206 : vector<1x96xf32> to vector<8x96xf32>
    %208 = arith.addf %204, %207 : vector<8x96xf32>
    %209 = vector.extract_strided_slice %208 {offsets = [0, 0], sizes = [8, 32], strides = [1, 1]} : vector<8x96xf32> to vector<8x32xf32>
    %210 = arith.mulf %209, %4 : vector<8x32xf32>
    %cst_99 = arith.constant dense<0.000000e+00> : vector<8x32xf32>
    %211 = tpu.matmul %209, %6, %cst_99 {dimension_numbers = #tpu.dot_dimension_numbers<[1], [0], [0], [1], [0, 0, 1, 1], [], []>} : vector<8x32xf32>, vector<32x32xf32>, vector<8x32xf32> -> vector<8x32xf32>
    %212 = arith.mulf %211, %5 : vector<8x32xf32>
    %213 = arith.addf %210, %212 : vector<8x32xf32>
    %214 = vector.extract_strided_slice %208 {offsets = [0, 32], sizes = [8, 32], strides = [1, 1]} : vector<8x96xf32> to vector<8x32xf32>
    %215 = arith.mulf %214, %4 : vector<8x32xf32>
    %cst_100 = arith.constant dense<0.000000e+00> : vector<8x32xf32>
    %216 = tpu.matmul %214, %6, %cst_100 {dimension_numbers = #tpu.dot_dimension_numbers<[1], [0], [0], [1], [0, 0, 1, 1], [], []>} : vector<8x32xf32>, vector<32x32xf32>, vector<8x32xf32> -> vector<8x32xf32>
    %217 = arith.mulf %216, %5 : vector<8x32xf32>
    %218 = arith.addf %215, %217 : vector<8x32xf32>
    %219 = vector.extract_strided_slice %208 {offsets = [0, 64], sizes = [8, 32], strides = [1, 1]} : vector<8x96xf32> to vector<8x32xf32>
    %220 = vector.extract_strided_slice %213 {offsets = [0, 0], sizes = [8, 8], strides = [1, 1]} : vector<8x32xf32> to vector<8x8xf32>
    %221 = vector.extract_strided_slice %218 {offsets = [0, 0], sizes = [8, 8], strides = [1, 1]} : vector<8x32xf32> to vector<8x8xf32>
    %222 = vector.extract_strided_slice %219 {offsets = [0, 0], sizes = [8, 8], strides = [1, 1]} : vector<8x32xf32> to vector<8x8xf32>
    %cst_101 = arith.constant dense<0.000000e+00> : vector<8x8xf32>
    %223 = tpu.matmul %220, %221, %cst_101 {dimension_numbers = #tpu.dot_dimension_numbers<[1], [1], [0], [0], [0, 0, 1, 0], [], []>} : vector<8x8xf32>, vector<8x8xf32>, vector<8x8xf32> -> vector<8x8xf32>
    %224 = vector.broadcast %3 : vector<1x8xf32> to vector<8x8xf32>
    %225 = arith.addf %223, %224 : vector<8x8xf32>
    %cst_102 = arith.constant dense<0xFF800000> : vector<8xf32>
    %226 = vector.multi_reduction <maximumf>, %225, %cst_102 [1] : vector<8x8xf32> to vector<8xf32>
    %227 = vector.shape_cast %226 : vector<8xf32> to vector<8x1xf32>
    %228 = vector.broadcast %227 : vector<8x1xf32> to vector<8x8xf32>
    %229 = arith.subf %225, %228 : vector<8x8xf32>
    %230 = math.exp %229 : vector<8x8xf32>
    %cst_103 = arith.constant dense<0.000000e+00> : vector<8xf32>
    %231 = vector.multi_reduction <add>, %230, %cst_103 [1] : vector<8x8xf32> to vector<8xf32>
    %232 = vector.shape_cast %231 : vector<8xf32> to vector<8x1xf32>
    %233 = tpu.reciprocal %232 {approx = true} : vector<8x1xf32> -> vector<8x1xf32>
    %234 = vector.broadcast %233 : vector<8x1xf32> to vector<8x8xf32>
    %235 = arith.mulf %230, %234 : vector<8x8xf32>
    %cst_104 = arith.constant dense<0.000000e+00> : vector<8x8xf32>
    %236 = tpu.matmul %235, %222, %cst_104 {dimension_numbers = #tpu.dot_dimension_numbers<[1], [0], [0], [1], [0, 0, 1, 1], [], []>} : vector<8x8xf32>, vector<8x8xf32>, vector<8x8xf32> -> vector<8x8xf32>
    %237 = vector.extract_strided_slice %213 {offsets = [0, 8], sizes = [8, 8], strides = [1, 1]} : vector<8x32xf32> to vector<8x8xf32>
    %238 = vector.extract_strided_slice %218 {offsets = [0, 8], sizes = [8, 8], strides = [1, 1]} : vector<8x32xf32> to vector<8x8xf32>
    %239 = vector.extract_strided_slice %219 {offsets = [0, 8], sizes = [8, 8], strides = [1, 1]} : vector<8x32xf32> to vector<8x8xf32>
    %cst_105 = arith.constant dense<0.000000e+00> : vector<8x8xf32>
    %240 = tpu.matmul %237, %238, %cst_105 {dimension_numbers = #tpu.dot_dimension_numbers<[1], [1], [0], [0], [0, 0, 1, 0], [], []>} : vector<8x8xf32>, vector<8x8xf32>, vector<8x8xf32> -> vector<8x8xf32>
    %241 = vector.broadcast %3 : vector<1x8xf32> to vector<8x8xf32>
    %242 = arith.addf %240, %241 : vector<8x8xf32>
    %cst_106 = arith.constant dense<0xFF800000> : vector<8xf32>
    %243 = vector.multi_reduction <maximumf>, %242, %cst_106 [1] : vector<8x8xf32> to vector<8xf32>
    %244 = vector.shape_cast %243 : vector<8xf32> to vector<8x1xf32>
    %245 = vector.broadcast %244 : vector<8x1xf32> to vector<8x8xf32>
    %246 = arith.subf %242, %245 : vector<8x8xf32>
    %247 = math.exp %246 : vector<8x8xf32>
    %cst_107 = arith.constant dense<0.000000e+00> : vector<8xf32>
    %248 = vector.multi_reduction <add>, %247, %cst_107 [1] : vector<8x8xf32> to vector<8xf32>
    %249 = vector.shape_cast %248 : vector<8xf32> to vector<8x1xf32>
    %250 = tpu.reciprocal %249 {approx = true} : vector<8x1xf32> -> vector<8x1xf32>
    %251 = vector.broadcast %250 : vector<8x1xf32> to vector<8x8xf32>
    %252 = arith.mulf %247, %251 : vector<8x8xf32>
    %cst_108 = arith.constant dense<0.000000e+00> : vector<8x8xf32>
    %253 = tpu.matmul %252, %239, %cst_108 {dimension_numbers = #tpu.dot_dimension_numbers<[1], [0], [0], [1], [0, 0, 1, 1], [], []>} : vector<8x8xf32>, vector<8x8xf32>, vector<8x8xf32> -> vector<8x8xf32>
    %254 = vector.extract_strided_slice %213 {offsets = [0, 16], sizes = [8, 8], strides = [1, 1]} : vector<8x32xf32> to vector<8x8xf32>
    %255 = vector.extract_strided_slice %218 {offsets = [0, 16], sizes = [8, 8], strides = [1, 1]} : vector<8x32xf32> to vector<8x8xf32>
    %256 = vector.extract_strided_slice %219 {offsets = [0, 16], sizes = [8, 8], strides = [1, 1]} : vector<8x32xf32> to vector<8x8xf32>
    %cst_109 = arith.constant dense<0.000000e+00> : vector<8x8xf32>
    %257 = tpu.matmul %254, %255, %cst_109 {dimension_numbers = #tpu.dot_dimension_numbers<[1], [1], [0], [0], [0, 0, 1, 0], [], []>} : vector<8x8xf32>, vector<8x8xf32>, vector<8x8xf32> -> vector<8x8xf32>
    %258 = vector.broadcast %3 : vector<1x8xf32> to vector<8x8xf32>
    %259 = arith.addf %257, %258 : vector<8x8xf32>
    %cst_110 = arith.constant dense<0xFF800000> : vector<8xf32>
    %260 = vector.multi_reduction <maximumf>, %259, %cst_110 [1] : vector<8x8xf32> to vector<8xf32>
    %261 = vector.shape_cast %260 : vector<8xf32> to vector<8x1xf32>
    %262 = vector.broadcast %261 : vector<8x1xf32> to vector<8x8xf32>
    %263 = arith.subf %259, %262 : vector<8x8xf32>
    %264 = math.exp %263 : vector<8x8xf32>
    %cst_111 = arith.constant dense<0.000000e+00> : vector<8xf32>
    %265 = vector.multi_reduction <add>, %264, %cst_111 [1] : vector<8x8xf32> to vector<8xf32>
    %266 = vector.shape_cast %265 : vector<8xf32> to vector<8x1xf32>
    %267 = tpu.reciprocal %266 {approx = true} : vector<8x1xf32> -> vector<8x1xf32>
    %268 = vector.broadcast %267 : vector<8x1xf32> to vector<8x8xf32>
    %269 = arith.mulf %264, %268 : vector<8x8xf32>
    %cst_112 = arith.constant dense<0.000000e+00> : vector<8x8xf32>
    %270 = tpu.matmul %269, %256, %cst_112 {dimension_numbers = #tpu.dot_dimension_numbers<[1], [0], [0], [1], [0, 0, 1, 1], [], []>} : vector<8x8xf32>, vector<8x8xf32>, vector<8x8xf32> -> vector<8x8xf32>
    %271 = vector.extract_strided_slice %213 {offsets = [0, 24], sizes = [8, 8], strides = [1, 1]} : vector<8x32xf32> to vector<8x8xf32>
    %272 = vector.extract_strided_slice %218 {offsets = [0, 24], sizes = [8, 8], strides = [1, 1]} : vector<8x32xf32> to vector<8x8xf32>
    %273 = vector.extract_strided_slice %219 {offsets = [0, 24], sizes = [8, 8], strides = [1, 1]} : vector<8x32xf32> to vector<8x8xf32>
    %cst_113 = arith.constant dense<0.000000e+00> : vector<8x8xf32>
    %274 = tpu.matmul %271, %272, %cst_113 {dimension_numbers = #tpu.dot_dimension_numbers<[1], [1], [0], [0], [0, 0, 1, 0], [], []>} : vector<8x8xf32>, vector<8x8xf32>, vector<8x8xf32> -> vector<8x8xf32>
    %275 = vector.broadcast %3 : vector<1x8xf32> to vector<8x8xf32>
    %276 = arith.addf %274, %275 : vector<8x8xf32>
    %cst_114 = arith.constant dense<0xFF800000> : vector<8xf32>
    %277 = vector.multi_reduction <maximumf>, %276, %cst_114 [1] : vector<8x8xf32> to vector<8xf32>
    %278 = vector.shape_cast %277 : vector<8xf32> to vector<8x1xf32>
    %279 = vector.broadcast %278 : vector<8x1xf32> to vector<8x8xf32>
    %280 = arith.subf %276, %279 : vector<8x8xf32>
    %281 = math.exp %280 : vector<8x8xf32>
    %cst_115 = arith.constant dense<0.000000e+00> : vector<8xf32>
    %282 = vector.multi_reduction <add>, %281, %cst_115 [1] : vector<8x8xf32> to vector<8xf32>
    %283 = vector.shape_cast %282 : vector<8xf32> to vector<8x1xf32>
    %284 = tpu.reciprocal %283 {approx = true} : vector<8x1xf32> -> vector<8x1xf32>
    %285 = vector.broadcast %284 : vector<8x1xf32> to vector<8x8xf32>
    %286 = arith.mulf %281, %285 : vector<8x8xf32>
    %cst_116 = arith.constant dense<0.000000e+00> : vector<8x8xf32>
    %287 = tpu.matmul %286, %273, %cst_116 {dimension_numbers = #tpu.dot_dimension_numbers<[1], [0], [0], [1], [0, 0, 1, 1], [], []>} : vector<8x8xf32>, vector<8x8xf32>, vector<8x8xf32> -> vector<8x8xf32>
    %288 = tpu.concatenate %236, %253, %270, %287 in 1 : vector<8x8xf32>, vector<8x8xf32>, vector<8x8xf32>, vector<8x8xf32> -> vector<8x32xf32>
    %c1_117 = arith.constant 1 : index
    %c0_118 = arith.constant 0 : index
    %c0_119 = arith.constant 0 : index
    %289 = vector.load %arg10[%c1_117, %c0_118, %c0_119] : memref<2x32x32xf32, #tpu.memory_space<vmem>>, vector<1x32x32xf32>
    %290 = vector.shape_cast %289 : vector<1x32x32xf32> to vector<32x32xf32>
    %cst_120 = arith.constant dense<0.000000e+00> : vector<8x32xf32>
    %291 = tpu.matmul %288, %290, %cst_120 {dimension_numbers = #tpu.dot_dimension_numbers<[1], [0], [0], [1], [0, 0, 1, 1], [], []>} : vector<8x32xf32>, vector<32x32xf32>, vector<8x32xf32> -> vector<8x32xf32>
    %292 = arith.addf %177, %291 : vector<8x32xf32>
    %c1_121 = arith.constant 1 : index
    %c0_122 = arith.constant 0 : index
    %c0_123 = arith.constant 0 : index
    %293 = vector.load %arg11[%c1_121, %c0_122, %c0_123] : memref<2x1x32xf32, #tpu.memory_space<vmem>>, vector<1x1x32xf32>
    %294 = vector.shape_cast %293 : vector<1x1x32xf32> to vector<1x32xf32>
    %295 = vector.broadcast %294 : vector<1x32xf32> to vector<8x32xf32>
    %296 = arith.addf %292, %295 : vector<8x32xf32>
    %c1_124 = arith.constant 1 : index
    %c0_125 = arith.constant 0 : index
    %c0_126 = arith.constant 0 : index
    %297 = vector.load %arg12[%c1_124, %c0_125, %c0_126] : memref<2x1x32xf32, #tpu.memory_space<vmem>>, vector<1x1x32xf32>
    %298 = vector.shape_cast %297 : vector<1x1x32xf32> to vector<1x32xf32>
    %c1_127 = arith.constant 1 : index
    %c0_128 = arith.constant 0 : index
    %c0_129 = arith.constant 0 : index
    %299 = vector.load %arg13[%c1_127, %c0_128, %c0_129] : memref<2x1x32xf32, #tpu.memory_space<vmem>>, vector<1x1x32xf32>
    %300 = vector.shape_cast %299 : vector<1x1x32xf32> to vector<1x32xf32>
    %cst_130 = arith.constant dense<0.000000e+00> : vector<8xf32>
    %301 = vector.multi_reduction <add>, %296, %cst_130 [1] : vector<8x32xf32> to vector<8xf32>
    %302 = vector.shape_cast %301 : vector<8xf32> to vector<8x1xf32>
    %cst_131 = arith.constant 3.200000e+01 : f32
    %303 = vector.broadcast %cst_131 : f32 to vector<8x1xf32>
    %304 = arith.divf %302, %303 : vector<8x1xf32>
    %305 = vector.broadcast %304 : vector<8x1xf32> to vector<8x32xf32>
    %306 = arith.subf %296, %305 : vector<8x32xf32>
    %307 = arith.mulf %306, %306 : vector<8x32xf32>
    %cst_132 = arith.constant dense<0.000000e+00> : vector<8xf32>
    %308 = vector.multi_reduction <add>, %307, %cst_132 [1] : vector<8x32xf32> to vector<8xf32>
    %309 = vector.shape_cast %308 : vector<8xf32> to vector<8x1xf32>
    %cst_133 = arith.constant 3.200000e+01 : f32
    %310 = vector.broadcast %cst_133 : f32 to vector<8x1xf32>
    %311 = arith.divf %309, %310 : vector<8x1xf32>
    %cst_134 = arith.constant 9.99999974E-6 : f32
    %312 = vector.broadcast %cst_134 : f32 to vector<8x1xf32>
    %313 = arith.addf %311, %312 : vector<8x1xf32>
    %314 = math.rsqrt %313 : vector<8x1xf32>
    %315 = vector.broadcast %314 : vector<8x1xf32> to vector<8x32xf32>
    %316 = arith.mulf %306, %315 : vector<8x32xf32>
    %317 = vector.broadcast %298 : vector<1x32xf32> to vector<8x32xf32>
    %318 = arith.mulf %316, %317 : vector<8x32xf32>
    %319 = vector.broadcast %300 : vector<1x32xf32> to vector<8x32xf32>
    %320 = arith.addf %318, %319 : vector<8x32xf32>
    %c1_135 = arith.constant 1 : index
    %c0_136 = arith.constant 0 : index
    %c0_137 = arith.constant 0 : index
    %321 = vector.load %arg14[%c1_135, %c0_136, %c0_137] : memref<2x32x128xf32, #tpu.memory_space<vmem>>, vector<1x32x128xf32>
    %322 = vector.shape_cast %321 : vector<1x32x128xf32> to vector<32x128xf32>
    %cst_138 = arith.constant dense<0.000000e+00> : vector<8x128xf32>
    %323 = tpu.matmul %320, %322, %cst_138 {dimension_numbers = #tpu.dot_dimension_numbers<[1], [0], [0], [1], [0, 0, 1, 1], [], []>} : vector<8x32xf32>, vector<32x128xf32>, vector<8x128xf32> -> vector<8x128xf32>
    %c1_139 = arith.constant 1 : index
    %c0_140 = arith.constant 0 : index
    %c0_141 = arith.constant 0 : index
    %324 = vector.load %arg15[%c1_139, %c0_140, %c0_141] : memref<2x1x128xf32, #tpu.memory_space<vmem>>, vector<1x1x128xf32>
    %325 = vector.shape_cast %324 : vector<1x1x128xf32> to vector<1x128xf32>
    %326 = vector.broadcast %325 : vector<1x128xf32> to vector<8x128xf32>
    %327 = arith.addf %323, %326 : vector<8x128xf32>
    %cst_142 = arith.constant 5.000000e-01 : f32
    %328 = vector.broadcast %cst_142 : f32 to vector<8x128xf32>
    %329 = arith.mulf %328, %327 : vector<8x128xf32>
    %cst_143 = arith.constant 4.471500e-02 : f32
    %330 = vector.broadcast %cst_143 : f32 to vector<8x128xf32>
    %331 = arith.mulf %330, %327 : vector<8x128xf32>
    %332 = arith.mulf %331, %327 : vector<8x128xf32>
    %333 = arith.mulf %332, %327 : vector<8x128xf32>
    %334 = arith.addf %327, %333 : vector<8x128xf32>
    %cst_144 = arith.constant 0.797884583 : f32
    %335 = vector.broadcast %cst_144 : f32 to vector<8x128xf32>
    %336 = arith.mulf %335, %334 : vector<8x128xf32>
    %337 = math.tanh %336 : vector<8x128xf32>
    %cst_145 = arith.constant 1.000000e+00 : f32
    %338 = vector.broadcast %cst_145 : f32 to vector<8x128xf32>
    %339 = arith.addf %338, %337 : vector<8x128xf32>
    %340 = arith.mulf %329, %339 : vector<8x128xf32>
    %c1_146 = arith.constant 1 : index
    %c0_147 = arith.constant 0 : index
    %c0_148 = arith.constant 0 : index
    %341 = vector.load %arg16[%c1_146, %c0_147, %c0_148] : memref<2x128x32xf32, #tpu.memory_space<vmem>>, vector<1x128x32xf32>
    %342 = vector.shape_cast %341 : vector<1x128x32xf32> to vector<128x32xf32>
    %cst_149 = arith.constant dense<0.000000e+00> : vector<8x32xf32>
    %343 = tpu.matmul %340, %342, %cst_149 {dimension_numbers = #tpu.dot_dimension_numbers<[1], [0], [0], [1], [0, 0, 1, 1], [], []>} : vector<8x128xf32>, vector<128x32xf32>, vector<8x32xf32> -> vector<8x32xf32>
    %344 = arith.addf %296, %343 : vector<8x32xf32>
    %c1_150 = arith.constant 1 : index
    %c0_151 = arith.constant 0 : index
    %c0_152 = arith.constant 0 : index
    %345 = vector.load %arg17[%c1_150, %c0_151, %c0_152] : memref<2x1x32xf32, #tpu.memory_space<vmem>>, vector<1x1x32xf32>
    %346 = vector.shape_cast %345 : vector<1x1x32xf32> to vector<1x32xf32>
    %347 = vector.broadcast %346 : vector<1x32xf32> to vector<8x32xf32>
    %348 = arith.addf %344, %347 : vector<8x32xf32>
    %349 = vector.extract_strided_slice %348 {offsets = [0, 0], sizes = [1, 32], strides = [1, 1]} : vector<8x32xf32> to vector<1x32xf32>
    %c0_153 = arith.constant 0 : index
    %c0_154 = arith.constant 0 : index
    %350 = vector.load %arg18[%c0_153, %c0_154] : memref<1x32xf32, #tpu.memory_space<vmem>>, vector<1x32xf32>
    %c0_155 = arith.constant 0 : index
    %c0_156 = arith.constant 0 : index
    %351 = vector.load %arg19[%c0_155, %c0_156] : memref<1x32xf32, #tpu.memory_space<vmem>>, vector<1x32xf32>
    %cst_157 = arith.constant dense<0.000000e+00> : vector<1xf32>
    %352 = vector.multi_reduction <add>, %349, %cst_157 [1] : vector<1x32xf32> to vector<1xf32>
    %353 = vector.shape_cast %352 : vector<1xf32> to vector<1x1xf32>
    %cst_158 = arith.constant 3.200000e+01 : f32
    %354 = vector.broadcast %cst_158 : f32 to vector<1x1xf32>
    %355 = arith.divf %353, %354 : vector<1x1xf32>
    %356 = vector.broadcast %355 : vector<1x1xf32> to vector<1x32xf32>
    %357 = arith.subf %349, %356 : vector<1x32xf32>
    %358 = arith.mulf %357, %357 : vector<1x32xf32>
    %cst_159 = arith.constant dense<0.000000e+00> : vector<1xf32>
    %359 = vector.multi_reduction <add>, %358, %cst_159 [1] : vector<1x32xf32> to vector<1xf32>
    %360 = vector.shape_cast %359 : vector<1xf32> to vector<1x1xf32>
    %cst_160 = arith.constant 3.200000e+01 : f32
    %361 = vector.broadcast %cst_160 : f32 to vector<1x1xf32>
    %362 = arith.divf %360, %361 : vector<1x1xf32>
    %cst_161 = arith.constant 9.99999974E-6 : f32
    %363 = vector.broadcast %cst_161 : f32 to vector<1x1xf32>
    %364 = arith.addf %362, %363 : vector<1x1xf32>
    %365 = math.rsqrt %364 : vector<1x1xf32>
    %366 = vector.broadcast %365 : vector<1x1xf32> to vector<1x32xf32>
    %367 = arith.mulf %357, %366 : vector<1x32xf32>
    %368 = arith.mulf %367, %350 : vector<1x32xf32>
    %369 = arith.addf %368, %351 : vector<1x32xf32>
    %c0_162 = arith.constant 0 : index
    %c0_163 = arith.constant 0 : index
    %370 = vector.load %arg20[%c0_162, %c0_163] : memref<32x16xf32, #tpu.memory_space<vmem>>, vector<32x16xf32>
    %cst_164 = arith.constant dense<0.000000e+00> : vector<1x16xf32>
    %371 = tpu.matmul %369, %370, %cst_164 {dimension_numbers = #tpu.dot_dimension_numbers<[1], [0], [0], [1], [0, 0, 1, 1], [], []>} : vector<1x32xf32>, vector<32x16xf32>, vector<1x16xf32> -> vector<1x16xf32>
    %c0_165 = arith.constant 0 : index
    %c0_166 = arith.constant 0 : index
    %372 = vector.load %arg21[%c0_165, %c0_166] : memref<1x16xf32, #tpu.memory_space<vmem>>, vector<1x16xf32>
    %373 = arith.addf %371, %372 : vector<1x16xf32>
    %cst_167 = arith.constant 5.000000e-01 : f32
    %374 = vector.broadcast %cst_167 : f32 to vector<1x16xf32>
    %375 = arith.mulf %374, %373 : vector<1x16xf32>
    %cst_168 = arith.constant 4.471500e-02 : f32
    %376 = vector.broadcast %cst_168 : f32 to vector<1x16xf32>
    %377 = arith.mulf %376, %373 : vector<1x16xf32>
    %378 = arith.mulf %377, %373 : vector<1x16xf32>
    %379 = arith.mulf %378, %373 : vector<1x16xf32>
    %380 = arith.addf %373, %379 : vector<1x16xf32>
    %cst_169 = arith.constant 0.797884583 : f32
    %381 = vector.broadcast %cst_169 : f32 to vector<1x16xf32>
    %382 = arith.mulf %381, %380 : vector<1x16xf32>
    %383 = math.tanh %382 : vector<1x16xf32>
    %cst_170 = arith.constant 1.000000e+00 : f32
    %384 = vector.broadcast %cst_170 : f32 to vector<1x16xf32>
    %385 = arith.addf %384, %383 : vector<1x16xf32>
    %386 = arith.mulf %375, %385 : vector<1x16xf32>
    %c0_171 = arith.constant 0 : index
    %c0_172 = arith.constant 0 : index
    %387 = vector.load %arg22[%c0_171, %c0_172] : memref<16x128xf32, #tpu.memory_space<vmem>>, vector<16x128xf32>
    %cst_173 = arith.constant dense<0.000000e+00> : vector<1x128xf32>
    %388 = tpu.matmul %386, %387, %cst_173 {dimension_numbers = #tpu.dot_dimension_numbers<[1], [0], [0], [1], [0, 0, 1, 1], [], []>} : vector<1x16xf32>, vector<16x128xf32>, vector<1x128xf32> -> vector<1x128xf32>
    %c0_174 = arith.constant 0 : index
    %c0_175 = arith.constant 0 : index
    %389 = vector.load %arg23[%c0_174, %c0_175] : memref<1x128xf32, #tpu.memory_space<vmem>>, vector<1x128xf32>
    %390 = arith.addf %388, %389 : vector<1x128xf32>
    %c0_176 = arith.constant 0 : index
    %c0_177 = arith.constant 0 : index
    %c0_178 = arith.constant 0 : index
    %391 = vector.load %arg24[%c0_176, %c0_177, %c0_178] : memref<1x1x128xf32, #tpu.memory_space<vmem>>, vector<1x1x128xf32>
    %392 = vector.shape_cast %391 : vector<1x1x128xf32> to vector<1x128xf32>
    %393 = vector.shape_cast %390 : vector<1x128xf32> to vector<1x1x128xf32>
    tpu.vector_store %arg24[%c0_176, %c0_177, %c0_178], %393 {strides = array<i32>} : memref<1x1x128xf32, #tpu.memory_space<vmem>>, vector<1x1x128xf32>,
    return
  }
  func.func @transform_0(%arg0: i32) -> (i32, i32, i32) {
    %c0_i32 = arith.constant 0 : i32
    %c0_i32_0 = arith.constant 0 : i32
    %c0_i32_1 = arith.constant 0 : i32
    return %arg0, %c0_i32, %c0_i32_0 : i32, i32, i32
  }
  func.func @transform_1(%arg0: i32) -> (i32, i32, i32) {
    %c0_i32 = arith.constant 0 : i32
    %c0_i32_0 = arith.constant 0 : i32
    %c0_i32_1 = arith.constant 0 : i32
    return %arg0, %c0_i32, %c0_i32_0 : i32, i32, i32
  }
  func.func @transform_2(%arg0: i32) -> (i32, i32) {
    %c0_i32 = arith.constant 0 : i32
    %c0_i32_0 = arith.constant 0 : i32
    %c0_i32_1 = arith.constant 0 : i32
    return %c0_i32, %c0_i32_0 : i32, i32
  }
  func.func @transform_3(%arg0: i32) -> (i32, i32) {
    %c0_i32 = arith.constant 0 : i32
    %c0_i32_0 = arith.constant 0 : i32
    %c0_i32_1 = arith.constant 0 : i32
    return %c0_i32, %c0_i32_0 : i32, i32
  }
  func.func @transform_4(%arg0: i32) -> (i32, i32) {
    %c0_i32 = arith.constant 0 : i32
    %c0_i32_0 = arith.constant 0 : i32
    %c0_i32_1 = arith.constant 0 : i32
    return %c0_i32, %c0_i32_0 : i32, i32
  }
  func.func @transform_5(%arg0: i32) -> (i32, i32, i32) {
    %c0_i32 = arith.constant 0 : i32
    %c0_i32_0 = arith.constant 0 : i32
    %c0_i32_1 = arith.constant 0 : i32
    %c0_i32_2 = arith.constant 0 : i32
    return %c0_i32, %c0_i32_0, %c0_i32_1 : i32, i32, i32
  }
  func.func @transform_6(%arg0: i32) -> (i32, i32, i32) {
    %c0_i32 = arith.constant 0 : i32
    %c0_i32_0 = arith.constant 0 : i32
    %c0_i32_1 = arith.constant 0 : i32
    %c0_i32_2 = arith.constant 0 : i32
    return %c0_i32, %c0_i32_0, %c0_i32_1 : i32, i32, i32
  }
  func.func @transform_7(%arg0: i32) -> (i32, i32, i32) {
    %c0_i32 = arith.constant 0 : i32
    %c0_i32_0 = arith.constant 0 : i32
    %c0_i32_1 = arith.constant 0 : i32
    %c0_i32_2 = arith.constant 0 : i32
    return %c0_i32, %c0_i32_0, %c0_i32_1 : i32, i32, i32
  }
  func.func @transform_8(%arg0: i32) -> (i32, i32, i32) {
    %c0_i32 = arith.constant 0 : i32
    %c0_i32_0 = arith.constant 0 : i32
    %c0_i32_1 = arith.constant 0 : i32
    %c0_i32_2 = arith.constant 0 : i32
    return %c0_i32, %c0_i32_0, %c0_i32_1 : i32, i32, i32
  }
  func.func @transform_9(%arg0: i32) -> (i32, i32, i32) {
    %c0_i32 = arith.constant 0 : i32
    %c0_i32_0 = arith.constant 0 : i32
    %c0_i32_1 = arith.constant 0 : i32
    %c0_i32_2 = arith.constant 0 : i32
    return %c0_i32, %c0_i32_0, %c0_i32_1 : i32, i32, i32
  }
  func.func @transform_10(%arg0: i32) -> (i32, i32, i32) {
    %c0_i32 = arith.constant 0 : i32
    %c0_i32_0 = arith.constant 0 : i32
    %c0_i32_1 = arith.constant 0 : i32
    %c0_i32_2 = arith.constant 0 : i32
    return %c0_i32, %c0_i32_0, %c0_i32_1 : i32, i32, i32
  }
  func.func @transform_11(%arg0: i32) -> (i32, i32, i32) {
    %c0_i32 = arith.constant 0 : i32
    %c0_i32_0 = arith.constant 0 : i32
    %c0_i32_1 = arith.constant 0 : i32
    %c0_i32_2 = arith.constant 0 : i32
    return %c0_i32, %c0_i32_0, %c0_i32_1 : i32, i32, i32
  }
  func.func @transform_12(%arg0: i32) -> (i32, i32, i32) {
    %c0_i32 = arith.constant 0 : i32
    %c0_i32_0 = arith.constant 0 : i32
    %c0_i32_1 = arith.constant 0 : i32
    %c0_i32_2 = arith.constant 0 : i32
    return %c0_i32, %c0_i32_0, %c0_i32_1 : i32, i32, i32
  }
  func.func @transform_13(%arg0: i32) -> (i32, i32, i32) {
    %c0_i32 = arith.constant 0 : i32
    %c0_i32_0 = arith.constant 0 : i32
    %c0_i32_1 = arith.constant 0 : i32
    %c0_i32_2 = arith.constant 0 : i32
    return %c0_i32, %c0_i32_0, %c0_i32_1 : i32, i32, i32
  }
  func.func @transform_14(%arg0: i32) -> (i32, i32, i32) {
    %c0_i32 = arith.constant 0 : i32
    %c0_i32_0 = arith.constant 0 : i32
    %c0_i32_1 = arith.constant 0 : i32
    %c0_i32_2 = arith.constant 0 : i32
    return %c0_i32, %c0_i32_0, %c0_i32_1 : i32, i32, i32
  }
  func.func @transform_15(%arg0: i32) -> (i32, i32, i32) {
    %c0_i32 = arith.constant 0 : i32
    %c0_i32_0 = arith.constant 0 : i32
    %c0_i32_1 = arith.constant 0 : i32
    %c0_i32_2 = arith.constant 0 : i32
    return %c0_i32, %c0_i32_0, %c0_i32_1 : i32, i32, i32
  }
  func.func @transform_16(%arg0: i32) -> (i32, i32, i32) {
    %c0_i32 = arith.constant 0 : i32
    %c0_i32_0 = arith.constant 0 : i32
    %c0_i32_1 = arith.constant 0 : i32
    %c0_i32_2 = arith.constant 0 : i32
    return %c0_i32, %c0_i32_0, %c0_i32_1 : i32, i32, i32
  }
  func.func @transform_17(%arg0: i32) -> (i32, i32) {
    %c0_i32 = arith.constant 0 : i32
    %c0_i32_0 = arith.constant 0 : i32
    %c0_i32_1 = arith.constant 0 : i32
    return %c0_i32, %c0_i32_0 : i32, i32
  }
  func.func @transform_18(%arg0: i32) -> (i32, i32) {
    %c0_i32 = arith.constant 0 : i32
    %c0_i32_0 = arith.constant 0 : i32
    %c0_i32_1 = arith.constant 0 : i32
    return %c0_i32, %c0_i32_0 : i32, i32
  }
  func.func @transform_19(%arg0: i32) -> (i32, i32) {
    %c0_i32 = arith.constant 0 : i32
    %c0_i32_0 = arith.constant 0 : i32
    %c0_i32_1 = arith.constant 0 : i32
    return %c0_i32, %c0_i32_0 : i32, i32
  }
  func.func @transform_20(%arg0: i32) -> (i32, i32) {
    %c0_i32 = arith.constant 0 : i32
    %c0_i32_0 = arith.constant 0 : i32
    %c0_i32_1 = arith.constant 0 : i32
    return %c0_i32, %c0_i32_0 : i32, i32
  }
  func.func @transform_21(%arg0: i32) -> (i32, i32) {
    %c0_i32 = arith.constant 0 : i32
    %c0_i32_0 = arith.constant 0 : i32
    %c0_i32_1 = arith.constant 0 : i32
    return %c0_i32, %c0_i32_0 : i32, i32
  }
  func.func @transform_22(%arg0: i32) -> (i32, i32) {
    %c0_i32 = arith.constant 0 : i32
    %c0_i32_0 = arith.constant 0 : i32
    %c0_i32_1 = arith.constant 0 : i32
    return %c0_i32, %c0_i32_0 : i32, i32
  }
  func.func @transform_23(%arg0: i32) -> (i32, i32, i32) {
    %c0_i32 = arith.constant 0 : i32
    %c0_i32_0 = arith.constant 0 : i32
    %c0_i32_1 = arith.constant 0 : i32
    return %arg0, %c0_i32, %c0_i32_0 : i32, i32, i32
  }
}

</mosaic_0001>

<llo_original>
// kernel: tpu_custom_call.1
$region0: #{tpu_custom_call.1}
  #allocation0 [shape = 'u32[]', space=smem, size = 0x4, offset = 0x4, fixed_abs, tag = 'smem constant byte address 0x4 - core index']
  #allocation1 [shape = 'u32[72,128]{1,0:T(1,128)}', space=vmem, size = 0x9000, scoped, tag = 'internal scratch']
  %s0 = inlined_call_operand.vmem [shape: f32[2,8,32], index: 0, kind: input, shape index: {}]
  %s1 = inlined_call_operand.vmem [shape: f32[2,1,8], index: 1, kind: input, shape index: {}]
  %s2 = inlined_call_operand.vmem [shape: f32[8,32], index: 2, kind: input, shape index: {}]
  %s3 = inlined_call_operand.vmem [shape: f32[8,32], index: 3, kind: input, shape index: {}]
  %s4 = inlined_call_operand.vmem [shape: f32[32,32], index: 4, kind: input, shape index: {}]
  %s5 = inlined_call_operand.vmem [shape: f32[2,1,32], index: 5, kind: input, shape index: {}]
  %s6 = inlined_call_operand.vmem [shape: f32[2,1,32], index: 6, kind: input, shape index: {}]
  %s7 = inlined_call_operand.vmem [shape: f32[2,32,96], index: 7, kind: input, shape index: {}]
  %s8 = inlined_call_operand.vmem [shape: f32[2,1,96], index: 8, kind: input, shape index: {}]
  %s9 = inlined_call_operand.vmem [shape: f32[2,32,32], index: 9, kind: input, shape index: {}]
  %s10 = inlined_call_operand.vmem [shape: f32[2,1,32], index: 10, kind: input, shape index: {}]
  %s11 = inlined_call_operand.vmem [shape: f32[2,1,32], index: 11, kind: input, shape index: {}]
  %s12 = inlined_call_operand.vmem [shape: f32[2,1,32], index: 12, kind: input, shape index: {}]
  %s13 = inlined_call_operand.vmem [shape: f32[2,32,128], index: 13, kind: input, shape index: {}]
  %s14 = inlined_call_operand.vmem [shape: f32[2,1,128], index: 14, kind: input, shape index: {}]
  %s15 = inlined_call_operand.vmem [shape: f32[2,128,32], index: 15, kind: input, shape index: {}]
  %s16 = inlined_call_operand.vmem [shape: f32[2,1,32], index: 16, kind: input, shape index: {}]
  %s17 = inlined_call_operand.vmem [shape: f32[1,32], index: 17, kind: input, shape index: {}]
  %s18 = inlined_call_operand.vmem [shape: f32[1,32], index: 18, kind: input, shape index: {}]
  %s19 = inlined_call_operand.vmem [shape: f32[32,16], index: 19, kind: input, shape index: {}]
  %s20 = inlined_call_operand.vmem [shape: f32[1,16], index: 20, kind: input, shape index: {}]
  %s21 = inlined_call_operand.vmem [shape: f32[16,128], index: 21, kind: input, shape index: {}]
  %s22 = inlined_call_operand.vmem [shape: f32[1,128], index: 22, kind: input, shape index: {}]
  %s23 = inlined_call_operand.hbm [shape: f32[2,1,128], index: 23, kind: output, shape index: {}]
  %s24 = sld [smem:[#allocation0]]
  $region125: #{tpu_custom_call.1} parent=0
    _
  %s26 = ssub.s32 1, %s24
  %s27 = scalar_select 0, %s26, %s24
  $region1: #{tpu_custom_call.1} parent=0
    #allocation2 [shape = 'u8[1024]{0}', space=vmem, size = 0x400, scoped, tag = 'output window, operand 0']
    #allocation3 [shape = 's32[2]{0}', space=sflag, size = 0x8, scoped, tag = 'scoped memory for tpu_custom_call.1']
    %28 = vsyncpa [#allocation3], 0
    %s29 = scalar_lea.sflag [#allocation3], 1
    %30 = vsyncpa %s29, 0
    loop: start=0, step=1, limit=4
    $region2: #{tpu_custom_call.1} parent=1 // loop_pre_header
      _
    $region3: #{tpu_custom_call.1} parent=1 // loop_header
      %s32 = sphi 0, %s36
      %p33 = scmp.ge.s32.totalorder %s32, 4
      %s42 = sphi 0, %s44
      %s45 = sphi 0, %s42
      %s46 = sphi 0, %s45
      %s62 = sphi 0, %s46
      %s68 = sphi 0, %s70
      %s71 = sphi 0, %s68
      %s72 = sphi 0, %s71
      %s88 = sphi 0, %s72
      %s92 = sphi 0, %s92
      %s94 = sphi 0, %s92
      %s95 = sphi 0, %s94
      %s109 = sphi 0, %s95
      %s113 = sphi 0, %s113
      %s115 = sphi 0, %s113
      %s116 = sphi 0, %s115
      %s130 = sphi 0, %s116
      %s134 = sphi 0, %s134
      %s136 = sphi 0, %s134
      %s137 = sphi 0, %s136
      %s151 = sphi 0, %s137
      %s155 = sphi 0, %s155
      %s157 = sphi 0, %s155
      %s158 = sphi 0, %s157
      %s172 = sphi 0, %s158
      %s176 = sphi 0, %s176
      %s178 = sphi 0, %s176
      %s179 = sphi 0, %s178
      %s193 = sphi 0, %s179
      %s197 = sphi 0, %s197
      %s199 = sphi 0, %s197
      %s200 = sphi 0, %s199
      %s214 = sphi 0, %s200
      %s218 = sphi 0, %s218
      %s220 = sphi 0, %s218
      %s221 = sphi 0, %s220
      %s235 = sphi 0, %s221
      %s239 = sphi 0, %s239
      %s241 = sphi 0, %s239
      %s242 = sphi 0, %s241
      %s256 = sphi 0, %s242
      %s260 = sphi 0, %s260
      %s262 = sphi 0, %s260
      %s263 = sphi 0, %s262
      %s277 = sphi 0, %s263
      %s281 = sphi 0, %s281
      %s283 = sphi 0, %s281
      %s284 = sphi 0, %s283
      %s298 = sphi 0, %s284
      %s302 = sphi 0, %s302
      %s304 = sphi 0, %s302
      %s305 = sphi 0, %s304
      %s319 = sphi 0, %s305
      %s323 = sphi 0, %s323
      %s325 = sphi 0, %s323
      %s326 = sphi 0, %s325
      %s340 = sphi 0, %s326
      %s344 = sphi 0, %s344
      %s346 = sphi 0, %s344
      %s347 = sphi 0, %s346
      %s361 = sphi 0, %s347
      %s365 = sphi 0, %s365
      %s367 = sphi 0, %s365
      %s368 = sphi 0, %s367
      %s382 = sphi 0, %s368
      %s386 = sphi 0, %s386
      %s388 = sphi 0, %s386
      %s389 = sphi 0, %s388
      %s403 = sphi 0, %s389
      %s407 = sphi 0, %s407
      %s409 = sphi 0, %s407
      %s410 = sphi 0, %s409
      %s424 = sphi 0, %s410
      %s428 = sphi 0, %s428
      %s430 = sphi 0, %s428
      %s431 = sphi 0, %s430
      %s445 = sphi 0, %s431
      %s449 = sphi 0, %s449
      %s451 = sphi 0, %s449
      %s452 = sphi 0, %s451
      %s466 = sphi 0, %s452
      %s470 = sphi 0, %s470
      %s472 = sphi 0, %s470
      %s473 = sphi 0, %s472
      %s487 = sphi 0, %s473
      %s491 = sphi 0, %s491
      %s493 = sphi 0, %s491
      %s494 = sphi 0, %s493
      %s508 = sphi 0, %s494
      %s512 = sphi 0, %s512
      %s514 = sphi 0, %s512
      %s515 = sphi 0, %s514
      %s529 = sphi 0, %s515
      %s535 = sphi 0, %s537
      %s538 = sphi 0, %s535
      %s539 = sphi 0, %s538
      %s555 = sphi 0, %s539
    $region4: #{tpu_custom_call.1} parent=1 // loop_header_branch
      %35 = sbr.rel (%p33) target = $region8
    $region5: #{tpu_custom_call.1} parent=1 // loop_body
      %s37 = ssub.s32 %s32, 1
      %s38 = ssub.s32 %s32, 2
      %s39 = sadd.s32 %s32, 1
      %s40 = ssub.s32 %s32, %s39
      %p41 = scmp.eq.s32.totalorder %s40, 0
      %s43 = sadd.s32 %s42, 1
      %s44 = scalar_select %p41, %s42, %s43
      %p47 = pneg %p41
      %p48 = scmp.eq.s32.totalorder %s32, 1
      %p49 = por %p47, %p48
      %p50 = scmp.ne.s32.totalorder %s42, %s45
      %p51 = scmp.eq.s32.totalorder %s32, 0
      %p52 = por %p50, %p51
      %p53 = scmp.ne.s32.totalorder %s42, %s45
      %p54 = scmp.eq.s32.totalorder %s37, 1
      %p55 = por %p53, %p54
      %p56 = scmp.ne.s32.totalorder %s45, %s46
      %p57 = scmp.eq.s32.totalorder %s37, 0
      %p58 = por %p56, %p57
      %p59 = scmp.ne.s32.totalorder %s45, %s46
      %p60 = scmp.eq.s32.totalorder %s38, 1
      %p61 = por %p59, %p60
      %p63 = scmp.ne.s32.totalorder %s46, %s62
      %p64 = scmp.eq.s32.totalorder %s38, 0
      %p65 = por %p63, %p64
      %s66 = ssub.s32 %s32, %s39
      %p67 = scmp.eq.s32.totalorder %s66, 0
      %s69 = sadd.s32 %s68, 1
      %s70 = scalar_select %p67, %s68, %s69
      %p73 = pneg %p67
      %p74 = scmp.eq.s32.totalorder %s32, 1
      %p75 = por %p73, %p74
      %p76 = scmp.ne.s32.totalorder %s68, %s71
      %p77 = scmp.eq.s32.totalorder %s32, 0
      %p78 = por %p76, %p77
      %p79 = scmp.ne.s32.totalorder %s68, %s71
      %p80 = scmp.eq.s32.totalorder %s37, 1
      %p81 = por %p79, %p80
      %p82 = scmp.ne.s32.totalorder %s71, %s72
      %p83 = scmp.eq.s32.totalorder %s37, 0
      %p84 = por %p82, %p83
      %p85 = scmp.ne.s32.totalorder %s71, %s72
      %p86 = scmp.eq.s32.totalorder %s38, 1
      %p87 = por %p85, %p86
      %p89 = scmp.ne.s32.totalorder %s72, %s88
      %p90 = scmp.eq.s32.totalorder %s38, 0
      %p91 = por %p89, %p90
      %s93 = sadd.s32 %s92, 1
      %p96 = scmp.eq.s32.totalorder %s32, 1
      %p97 = scmp.ne.s32.totalorder %s92, %s94
      %p98 = scmp.eq.s32.totalorder %s32, 0
      %p99 = por %p97, %p98
      %p100 = scmp.ne.s32.totalorder %s92, %s94
      %p101 = scmp.eq.s32.totalorder %s37, 1
      %p102 = por %p100, %p101
      %p103 = scmp.ne.s32.totalorder %s94, %s95
      %p104 = scmp.eq.s32.totalorder %s37, 0
      %p105 = por %p103, %p104
      %p106 = scmp.ne.s32.totalorder %s94, %s95
      %p107 = scmp.eq.s32.totalorder %s38, 1
      %p108 = por %p106, %p107
      %p110 = scmp.ne.s32.totalorder %s95, %s109
      %p111 = scmp.eq.s32.totalorder %s38, 0
      %p112 = por %p110, %p111
      %s114 = sadd.s32 %s113, 1
      %p117 = scmp.eq.s32.totalorder %s32, 1
      %p118 = scmp.ne.s32.totalorder %s113, %s115
      %p119 = scmp.eq.s32.totalorder %s32, 0
      %p120 = por %p118, %p119
      %p121 = scmp.ne.s32.totalorder %s113, %s115
      %p122 = scmp.eq.s32.totalorder %s37, 1
      %p123 = por %p121, %p122
      %p124 = scmp.ne.s32.totalorder %s115, %s116
      %p125 = scmp.eq.s32.totalorder %s37, 0
      %p126 = por %p124, %p125
      %p127 = scmp.ne.s32.totalorder %s115, %s116
      %p128 = scmp.eq.s32.totalorder %s38, 1
      %p129 = por %p127, %p128
      %p131 = scmp.ne.s32.totalorder %s116, %s130
      %p132 = scmp.eq.s32.totalorder %s38, 0
      %p133 = por %p131, %p132
      %s135 = sadd.s32 %s134, 1
      %p138 = scmp.eq.s32.totalorder %s32, 1
      %p139 = scmp.ne.s32.totalorder %s134, %s136
      %p140 = scmp.eq.s32.totalorder %s32, 0
      %p141 = por %p139, %p140
      %p142 = scmp.ne.s32.totalorder %s134, %s136
      %p143 = scmp.eq.s32.totalorder %s37, 1
      %p144 = por %p142, %p143
      %p145 = scmp.ne.s32.totalorder %s136, %s137
      %p146 = scmp.eq.s32.totalorder %s37, 0
      %p147 = por %p145, %p146
      %p148 = scmp.ne.s32.totalorder %s136, %s137
      %p149 = scmp.eq.s32.totalorder %s38, 1
      %p150 = por %p148, %p149
      %p152 = scmp.ne.s32.totalorder %s137, %s151
      %p153 = scmp.eq.s32.totalorder %s38, 0
      %p154 = por %p152, %p153
      %s156 = sadd.s32 %s155, 1
      %p159 = scmp.eq.s32.totalorder %s32, 1
      %p160 = scmp.ne.s32.totalorder %s155, %s157
      %p161 = scmp.eq.s32.totalorder %s32, 0
      %p162 = por %p160, %p161
      %p163 = scmp.ne.s32.totalorder %s155, %s157
      %p164 = scmp.eq.s32.totalorder %s37, 1
      %p165 = por %p163, %p164
      %p166 = scmp.ne.s32.totalorder %s157, %s158
      %p167 = scmp.eq.s32.totalorder %s37, 0
      %p168 = por %p166, %p167
      %p169 = scmp.ne.s32.totalorder %s157, %s158
      %p170 = scmp.eq.s32.totalorder %s38, 1
      %p171 = por %p169, %p170
      %p173 = scmp.ne.s32.totalorder %s158, %s172
      %p174 = scmp.eq.s32.totalorder %s38, 0
      %p175 = por %p173, %p174
      %s177 = sadd.s32 %s176, 1
      %p180 = scmp.eq.s32.totalorder %s32, 1
      %p181 = scmp.ne.s32.totalorder %s176, %s178
      %p182 = scmp.eq.s32.totalorder %s32, 0
      %p183 = por %p181, %p182
      %p184 = scmp.ne.s32.totalorder %s176, %s178
      %p185 = scmp.eq.s32.totalorder %s37, 1
      %p186 = por %p184, %p185
      %p187 = scmp.ne.s32.totalorder %s178, %s179
      %p188 = scmp.eq.s32.totalorder %s37, 0
      %p189 = por %p187, %p188
      %p190 = scmp.ne.s32.totalorder %s178, %s179
      %p191 = scmp.eq.s32.totalorder %s38, 1
      %p192 = por %p190, %p191
      %p194 = scmp.ne.s32.totalorder %s179, %s193
      %p195 = scmp.eq.s32.totalorder %s38, 0
      %p196 = por %p194, %p195
      %s198 = sadd.s32 %s197, 1
      %p201 = scmp.eq.s32.totalorder %s32, 1
      %p202 = scmp.ne.s32.totalorder %s197, %s199
      %p203 = scmp.eq.s32.totalorder %s32, 0
      %p204 = por %p202, %p203
      %p205 = scmp.ne.s32.totalorder %s197, %s199
      %p206 = scmp.eq.s32.totalorder %s37, 1
      %p207 = por %p205, %p206
      %p208 = scmp.ne.s32.totalorder %s199, %s200
      %p209 = scmp.eq.s32.totalorder %s37, 0
      %p210 = por %p208, %p209
      %p211 = scmp.ne.s32.totalorder %s199, %s200
      %p212 = scmp.eq.s32.totalorder %s38, 1
      %p213 = por %p211, %p212
      %p215 = scmp.ne.s32.totalorder %s200, %s214
      %p216 = scmp.eq.s32.totalorder %s38, 0
      %p217 = por %p215, %p216
      %s219 = sadd.s32 %s218, 1
      %p222 = scmp.eq.s32.totalorder %s32, 1
      %p223 = scmp.ne.s32.totalorder %s218, %s220
      %p224 = scmp.eq.s32.totalorder %s32, 0
      %p225 = por %p223, %p224
      %p226 = scmp.ne.s32.totalorder %s218, %s220
      %p227 = scmp.eq.s32.totalorder %s37, 1
      %p228 = por %p226, %p227
      %p229 = scmp.ne.s32.totalorder %s220, %s221
      %p230 = scmp.eq.s32.totalorder %s37, 0
      %p231 = por %p229, %p230
      %p232 = scmp.ne.s32.totalorder %s220, %s221
      %p233 = scmp.eq.s32.totalorder %s38, 1
      %p234 = por %p232, %p233
      %p236 = scmp.ne.s32.totalorder %s221, %s235
      %p237 = scmp.eq.s32.totalorder %s38, 0
      %p238 = por %p236, %p237
      %s240 = sadd.s32 %s239, 1
      %p243 = scmp.eq.s32.totalorder %s32, 1
      %p244 = scmp.ne.s32.totalorder %s239, %s241
      %p245 = scmp.eq.s32.totalorder %s32, 0
      %p246 = por %p244, %p245
      %p247 = scmp.ne.s32.totalorder %s239, %s241
      %p248 = scmp.eq.s32.totalorder %s37, 1
      %p249 = por %p247, %p248
      %p250 = scmp.ne.s32.totalorder %s241, %s242
      %p251 = scmp.eq.s32.totalorder %s37, 0
      %p252 = por %p250, %p251
      %p253 = scmp.ne.s32.totalorder %s241, %s242
      %p254 = scmp.eq.s32.totalorder %s38, 1
      %p255 = por %p253, %p254
      %p257 = scmp.ne.s32.totalorder %s242, %s256
      %p258 = scmp.eq.s32.totalorder %s38, 0
      %p259 = por %p257, %p258
      %s261 = sadd.s32 %s260, 1
      %p264 = scmp.eq.s32.totalorder %s32, 1
      %p265 = scmp.ne.s32.totalorder %s260, %s262
      %p266 = scmp.eq.s32.totalorder %s32, 0
      %p267 = por %p265, %p266
      %p268 = scmp.ne.s32.totalorder %s260, %s262
      %p269 = scmp.eq.s32.totalorder %s37, 1
      %p270 = por %p268, %p269
      %p271 = scmp.ne.s32.totalorder %s262, %s263
      %p272 = scmp.eq.s32.totalorder %s37, 0
      %p273 = por %p271, %p272
      %p274 = scmp.ne.s32.totalorder %s262, %s263
      %p275 = scmp.eq.s32.totalorder %s38, 1
      %p276 = por %p274, %p275
      %p278 = scmp.ne.s32.totalorder %s263, %s277
      %p279 = scmp.eq.s32.totalorder %s38, 0
      %p280 = por %p278, %p279
      %s282 = sadd.s32 %s281, 1
      %p285 = scmp.eq.s32.totalorder %s32, 1
      %p286 = scmp.ne.s32.totalorder %s281, %s283
      %p287 = scmp.eq.s32.totalorder %s32, 0
      %p288 = por %p286, %p287
      %p289 = scmp.ne.s32.totalorder %s281, %s283
      %p290 = scmp.eq.s32.totalorder %s37, 1
      %p291 = por %p289, %p290
      %p292 = scmp.ne.s32.totalorder %s283, %s284
      %p293 = scmp.eq.s32.totalorder %s37, 0
      %p294 = por %p292, %p293
      %p295 = scmp.ne.s32.totalorder %s283, %s284
      %p296 = scmp.eq.s32.totalorder %s38, 1
      %p297 = por %p295, %p296
      %p299 = scmp.ne.s32.totalorder %s284, %s298
      %p300 = scmp.eq.s32.totalorder %s38, 0
      %p301 = por %p299, %p300
      %s303 = sadd.s32 %s302, 1
      %p306 = scmp.eq.s32.totalorder %s32, 1
      %p307 = scmp.ne.s32.totalorder %s302, %s304
      %p308 = scmp.eq.s32.totalorder %s32, 0
      %p309 = por %p307, %p308
      %p310 = scmp.ne.s32.totalorder %s302, %s304
      %p311 = scmp.eq.s32.totalorder %s37, 1
      %p312 = por %p310, %p311
      %p313 = scmp.ne.s32.totalorder %s304, %s305
      %p314 = scmp.eq.s32.totalorder %s37, 0
      %p315 = por %p313, %p314
      %p316 = scmp.ne.s32.totalorder %s304, %s305
      %p317 = scmp.eq.s32.totalorder %s38, 1
      %p318 = por %p316, %p317
      %p320 = scmp.ne.s32.totalorder %s305, %s319
      %p321 = scmp.eq.s32.totalorder %s38, 0
      %p322 = por %p320, %p321
      %s324 = sadd.s32 %s323, 1
      %p327 = scmp.eq.s32.totalorder %s32, 1
      %p328 = scmp.ne.s32.totalorder %s323, %s325
      %p329 = scmp.eq.s32.totalorder %s32, 0
      %p330 = por %p328, %p329
      %p331 = scmp.ne.s32.totalorder %s323, %s325
      %p332 = scmp.eq.s32.totalorder %s37, 1
      %p333 = por %p331, %p332
      %p334 = scmp.ne.s32.totalorder %s325, %s326
      %p335 = scmp.eq.s32.totalorder %s37, 0
      %p336 = por %p334, %p335
      %p337 = scmp.ne.s32.totalorder %s325, %s326
      %p338 = scmp.eq.s32.totalorder %s38, 1
      %p339 = por %p337, %p338
      %p341 = scmp.ne.s32.totalorder %s326, %s340
      %p342 = scmp.eq.s32.totalorder %s38, 0
      %p343 = por %p341, %p342
      %s345 = sadd.s32 %s344, 1
      %p348 = scmp.eq.s32.totalorder %s32, 1
      %p349 = scmp.ne.s32.totalorder %s344, %s346
      %p350 = scmp.eq.s32.totalorder %s32, 0
      %p351 = por %p349, %p350
      %p352 = scmp.ne.s32.totalorder %s344, %s346
      %p353 = scmp.eq.s32.totalorder %s37, 1
      %p354 = por %p352, %p353
      %p355 = scmp.ne.s32.totalorder %s346, %s347
      %p356 = scmp.eq.s32.totalorder %s37, 0
      %p357 = por %p355, %p356
      %p358 = scmp.ne.s32.totalorder %s346, %s347
      %p359 = scmp.eq.s32.totalorder %s38, 1
      %p360 = por %p358, %p359
      %p362 = scmp.ne.s32.totalorder %s347, %s361
      %p363 = scmp.eq.s32.totalorder %s38, 0
      %p364 = por %p362, %p363
      %s366 = sadd.s32 %s365, 1
      %p369 = scmp.eq.s32.totalorder %s32, 1
      %p370 = scmp.ne.s32.totalorder %s365, %s367
      %p371 = scmp.eq.s32.totalorder %s32, 0
      %p372 = por %p370, %p371
      %p373 = scmp.ne.s32.totalorder %s365, %s367
      %p374 = scmp.eq.s32.totalorder %s37, 1
      %p375 = por %p373, %p374
      %p376 = scmp.ne.s32.totalorder %s367, %s368
      %p377 = scmp.eq.s32.totalorder %s37, 0
      %p378 = por %p376, %p377
      %p379 = scmp.ne.s32.totalorder %s367, %s368
      %p380 = scmp.eq.s32.totalorder %s38, 1
      %p381 = por %p379, %p380
      %p383 = scmp.ne.s32.totalorder %s368, %s382
      %p384 = scmp.eq.s32.totalorder %s38, 0
      %p385 = por %p383, %p384
      %s387 = sadd.s32 %s386, 1
      %p390 = scmp.eq.s32.totalorder %s32, 1
      %p391 = scmp.ne.s32.totalorder %s386, %s388
      %p392 = scmp.eq.s32.totalorder %s32, 0
      %p393 = por %p391, %p392
      %p394 = scmp.ne.s32.totalorder %s386, %s388
      %p395 = scmp.eq.s32.totalorder %s37, 1
      %p396 = por %p394, %p395
      %p397 = scmp.ne.s32.totalorder %s388, %s389
      %p398 = scmp.eq.s32.totalorder %s37, 0
      %p399 = por %p397, %p398
      %p400 = scmp.ne.s32.totalorder %s388, %s389
      %p401 = scmp.eq.s32.totalorder %s38, 1
      %p402 = por %p400, %p401
      %p404 = scmp.ne.s32.totalorder %s389, %s403
      %p405 = scmp.eq.s32.totalorder %s38, 0
      %p406 = por %p404, %p405
      %s408 = sadd.s32 %s407, 1
      %p411 = scmp.eq.s32.totalorder %s32, 1
      %p412 = scmp.ne.s32.totalorder %s407, %s409
      %p413 = scmp.eq.s32.totalorder %s32, 0
      %p414 = por %p412, %p413
      %p415 = scmp.ne.s32.totalorder %s407, %s409
      %p416 = scmp.eq.s32.totalorder %s37, 1
      %p417 = por %p415, %p416
      %p418 = scmp.ne.s32.totalorder %s409, %s410
      %p419 = scmp.eq.s32.totalorder %s37, 0
      %p420 = por %p418, %p419
      %p421 = scmp.ne.s32.totalorder %s409, %s410
      %p422 = scmp.eq.s32.totalorder %s38, 1
      %p423 = por %p421, %p422
      %p425 = scmp.ne.s32.totalorder %s410, %s424
      %p426 = scmp.eq.s32.totalorder %s38, 0
      %p427 = por %p425, %p426
      %s429 = sadd.s32 %s428, 1
      %p432 = scmp.eq.s32.totalorder %s32, 1
      %p433 = scmp.ne.s32.totalorder %s428, %s430
      %p434 = scmp.eq.s32.totalorder %s32, 0
      %p435 = por %p433, %p434
      %p436 = scmp.ne.s32.totalorder %s428, %s430
      %p437 = scmp.eq.s32.totalorder %s37, 1
      %p438 = por %p436, %p437
      %p439 = scmp.ne.s32.totalorder %s430, %s431
      %p440 = scmp.eq.s32.totalorder %s37, 0
      %p441 = por %p439, %p440
      %p442 = scmp.ne.s32.totalorder %s430, %s431
      %p443 = scmp.eq.s32.totalorder %s38, 1
      %p444 = por %p442, %p443
      %p446 = scmp.ne.s32.totalorder %s431, %s445
      %p447 = scmp.eq.s32.totalorder %s38, 0
      %p448 = por %p446, %p447
      %s450 = sadd.s32 %s449, 1
      %p453 = scmp.eq.s32.totalorder %s32, 1
      %p454 = scmp.ne.s32.totalorder %s449, %s451
      %p455 = scmp.eq.s32.totalorder %s32, 0
      %p456 = por %p454, %p455
      %p457 = scmp.ne.s32.totalorder %s449, %s451
      %p458 = scmp.eq.s32.totalorder %s37, 1
      %p459 = por %p457, %p458
      %p460 = scmp.ne.s32.totalorder %s451, %s452
      %p461 = scmp.eq.s32.totalorder %s37, 0
      %p462 = por %p460, %p461
      %p463 = scmp.ne.s32.totalorder %s451, %s452
      %p464 = scmp.eq.s32.totalorder %s38, 1
      %p465 = por %p463, %p464
      %p467 = scmp.ne.s32.totalorder %s452, %s466
      %p468 = scmp.eq.s32.totalorder %s38, 0
      %p469 = por %p467, %p468
      %s471 = sadd.s32 %s470, 1
      %p474 = scmp.eq.s32.totalorder %s32, 1
      %p475 = scmp.ne.s32.totalorder %s470, %s472
      %p476 = scmp.eq.s32.totalorder %s32, 0
      %p477 = por %p475, %p476
      %p478 = scmp.ne.s32.totalorder %s470, %s472
      %p479 = scmp.eq.s32.totalorder %s37, 1
      %p480 = por %p478, %p479
      %p481 = scmp.ne.s32.totalorder %s472, %s473
      %p482 = scmp.eq.s32.totalorder %s37, 0
      %p483 = por %p481, %p482
      %p484 = scmp.ne.s32.totalorder %s472, %s473
      %p485 = scmp.eq.s32.totalorder %s38, 1
      %p486 = por %p484, %p485
      %p488 = scmp.ne.s32.totalorder %s473, %s487
      %p489 = scmp.eq.s32.totalorder %s38, 0
      %p490 = por %p488, %p489
      %s492 = sadd.s32 %s491, 1
      %p495 = scmp.eq.s32.totalorder %s32, 1
      %p496 = scmp.ne.s32.totalorder %s491, %s493
      %p497 = scmp.eq.s32.totalorder %s32, 0
      %p498 = por %p496, %p497
      %p499 = scmp.ne.s32.totalorder %s491, %s493
      %p500 = scmp.eq.s32.totalorder %s37, 1
      %p501 = por %p499, %p500
      %p502 = scmp.ne.s32.totalorder %s493, %s494
      %p503 = scmp.eq.s32.totalorder %s37, 0
      %p504 = por %p502, %p503
      %p505 = scmp.ne.s32.totalorder %s493, %s494
      %p506 = scmp.eq.s32.totalorder %s38, 1
      %p507 = por %p505, %p506
      %p509 = scmp.ne.s32.totalorder %s494, %s508
      %p510 = scmp.eq.s32.totalorder %s38, 0
      %p511 = por %p509, %p510
      %s513 = sadd.s32 %s512, 1
      %p516 = scmp.eq.s32.totalorder %s32, 1
      %p517 = scmp.ne.s32.totalorder %s512, %s514
      %p518 = scmp.eq.s32.totalorder %s32, 0
      %p519 = por %p517, %p518
      %p520 = scmp.ne.s32.totalorder %s512, %s514
      %p521 = scmp.eq.s32.totalorder %s37, 1
      %p522 = por %p520, %p521
      %p523 = scmp.ne.s32.totalorder %s514, %s515
      %p524 = scmp.eq.s32.totalorder %s37, 0
      %p525 = por %p523, %p524
      %p526 = scmp.ne.s32.totalorder %s514, %s515
      %p527 = scmp.eq.s32.totalorder %s38, 1
      %p528 = por %p526, %p527
      %p530 = scmp.ne.s32.totalorder %s515, %s529
      %p531 = scmp.eq.s32.totalorder %s38, 0
      %p532 = por %p530, %p531
      %s533 = ssub.s32 %s32, %s39
      %p534 = scmp.eq.s32.totalorder %s533, 0
      %s536 = sadd.s32 %s535, 1
      %s537 = scalar_select %p534, %s535, %s536
      %p540 = pneg %p534
      %p541 = scmp.eq.s32.totalorder %s32, 1
      %p542 = por %p540, %p541
      %p543 = scmp.ne.s32.totalorder %s535, %s538
      %p544 = scmp.eq.s32.totalorder %s32, 0
      %p545 = por %p543, %p544
      %p546 = scmp.ne.s32.totalorder %s535, %s538
      %p547 = scmp.eq.s32.totalorder %s37, 1
      %p548 = por %p546, %p547
      %p549 = scmp.ne.s32.totalorder %s538, %s539
      %p550 = scmp.eq.s32.totalorder %s37, 0
      %p551 = por %p549, %p550
      %p552 = scmp.ne.s32.totalorder %s538, %s539
      %p553 = scmp.eq.s32.totalorder %s38, 1
      %p554 = por %p552, %p553
      %p556 = scmp.ne.s32.totalorder %s539, %s555
      %p557 = scmp.eq.s32.totalorder %s38, 0
      %p558 = por %p556, %p557
      %p559 = scmp.le.s32.totalorder 1, %s32
      %p560 = scmp.lt.s32.totalorder %s32, 3
      %p561 = pnand %p559, %p560
      %p562 = pneg %p561
      // Predicated region
      $region9: #{tpu_custom_call.1} parent=5 // pred_check
        _
      $region10: #{tpu_custom_call.1} parent=5 // pred_check_branch
        %564 = sbr.rel (%p561) target = $region12
      $region11: #{tpu_custom_call.1} parent=5 // pred_region
        %s565 = ssub.s32 %s32, 1
        // Predicated region
        $region13: #{tpu_custom_call.1} parent=11 // pred_check
          %p566 = pneg %p105
        $region14: #{tpu_custom_call.1} parent=11 // pred_check_branch
          %568 = sbr.rel (%p566) target = $region16
        $region15: #{tpu_custom_call.1} parent=11 // pred_region
          _
        $region16: #{tpu_custom_call.1} parent=11 // pred_fallthru
          _
        // Predicated region
        $region17: #{tpu_custom_call.1} parent=11 // pred_check
          %p569 = pneg %p126
        $region18: #{tpu_custom_call.1} parent=11 // pred_check_branch
          %571 = sbr.rel (%p569) target = $region20
        $region19: #{tpu_custom_call.1} parent=11 // pred_region
          _
        $region20: #{tpu_custom_call.1} parent=11 // pred_fallthru
          _
        // Predicated region
        $region21: #{tpu_custom_call.1} parent=11 // pred_check
          %p572 = pneg %p147
        $region22: #{tpu_custom_call.1} parent=11 // pred_check_branch
          %574 = sbr.rel (%p572) target = $region24
        $region23: #{tpu_custom_call.1} parent=11 // pred_region
          _
        $region24: #{tpu_custom_call.1} parent=11 // pred_fallthru
          _
        // Predicated region
        $region25: #{tpu_custom_call.1} parent=11 // pred_check
          %p575 = pneg %p168
        $region26: #{tpu_custom_call.1} parent=11 // pred_check_branch
          %577 = sbr.rel (%p575) target = $region28
        $region27: #{tpu_custom_call.1} parent=11 // pred_region
          _
        $region28: #{tpu_custom_call.1} parent=11 // pred_fallthru
          _
        // Predicated region
        $region29: #{tpu_custom_call.1} parent=11 // pred_check
          %p578 = pneg %p189
        $region30: #{tpu_custom_call.1} parent=11 // pred_check_branch
          %580 = sbr.rel (%p578) target = $region32
        $region31: #{tpu_custom_call.1} parent=11 // pred_region
          _
        $region32: #{tpu_custom_call.1} parent=11 // pred_fallthru
          _
        // Predicated region
        $region33: #{tpu_custom_call.1} parent=11 // pred_check
          %p581 = pneg %p210
        $region34: #{tpu_custom_call.1} parent=11 // pred_check_branch
          %583 = sbr.rel (%p581) target = $region36
        $region35: #{tpu_custom_call.1} parent=11 // pred_region
          _
        $region36: #{tpu_custom_call.1} parent=11 // pred_fallthru
          _
        // Predicated region
        $region37: #{tpu_custom_call.1} parent=11 // pred_check
          %p584 = pneg %p231
        $region38: #{tpu_custom_call.1} parent=11 // pred_check_branch
          %586 = sbr.rel (%p584) target = $region40
        $region39: #{tpu_custom_call.1} parent=11 // pred_region
          _
        $region40: #{tpu_custom_call.1} parent=11 // pred_fallthru
          _
        // Predicated region
        $region41: #{tpu_custom_call.1} parent=11 // pred_check
          %p587 = pneg %p252
        $region42: #{tpu_custom_call.1} parent=11 // pred_check_branch
          %589 = sbr.rel (%p587) target = $region44
        $region43: #{tpu_custom_call.1} parent=11 // pred_region
          _
        $region44: #{tpu_custom_call.1} parent=11 // pred_fallthru
          _
        // Predicated region
        $region45: #{tpu_custom_call.1} parent=11 // pred_check
          %p590 = pneg %p273
        $region46: #{tpu_custom_call.1} parent=11 // pred_check_branch
          %592 = sbr.rel (%p590) target = $region48
        $region47: #{tpu_custom_call.1} parent=11 // pred_region
          _
        $region48: #{tpu_custom_call.1} parent=11 // pred_fallthru
          _
        // Predicated region
        $region49: #{tpu_custom_call.1} parent=11 // pred_check
          %p593 = pneg %p294
        $region50: #{tpu_custom_call.1} parent=11 // pred_check_branch
          %595 = sbr.rel (%p593) target = $region52
        $region51: #{tpu_custom_call.1} parent=11 // pred_region
          _
        $region52: #{tpu_custom_call.1} parent=11 // pred_fallthru
          _
        // Predicated region
        $region53: #{tpu_custom_call.1} parent=11 // pred_check
          %p596 = pneg %p315
        $region54: #{tpu_custom_call.1} parent=11 // pred_check_branch
          %598 = sbr.rel (%p596) target = $region56
        $region55: #{tpu_custom_call.1} parent=11 // pred_region
          _
        $region56: #{tpu_custom_call.1} parent=11 // pred_fallthru
          _
        // Predicated region
        $region57: #{tpu_custom_call.1} parent=11 // pred_check
          %p599 = pneg %p336
        $region58: #{tpu_custom_call.1} parent=11 // pred_check_branch
          %601 = sbr.rel (%p599) target = $region60
        $region59: #{tpu_custom_call.1} parent=11 // pred_region
          _
        $region60: #{tpu_custom_call.1} parent=11 // pred_fallthru
          _
        // Predicated region
        $region61: #{tpu_custom_call.1} parent=11 // pred_check
          %p602 = pneg %p357
        $region62: #{tpu_custom_call.1} parent=11 // pred_check_branch
          %604 = sbr.rel (%p602) target = $region64
        $region63: #{tpu_custom_call.1} parent=11 // pred_region
          _
        $region64: #{tpu_custom_call.1} parent=11 // pred_fallthru
          _
        // Predicated region
        $region65: #{tpu_custom_call.1} parent=11 // pred_check
          %p605 = pneg %p378
        $region66: #{tpu_custom_call.1} parent=11 // pred_check_branch
          %607 = sbr.rel (%p605) target = $region68
        $region67: #{tpu_custom_call.1} parent=11 // pred_region
          _
        $region68: #{tpu_custom_call.1} parent=11 // pred_fallthru
          _
        // Predicated region
        $region69: #{tpu_custom_call.1} parent=11 // pred_check
          %p608 = pneg %p399
        $region70: #{tpu_custom_call.1} parent=11 // pred_check_branch
          %610 = sbr.rel (%p608) target = $region72
        $region71: #{tpu_custom_call.1} parent=11 // pred_region
          _
        $region72: #{tpu_custom_call.1} parent=11 // pred_fallthru
          _
        // Predicated region
        $region73: #{tpu_custom_call.1} parent=11 // pred_check
          %p611 = pneg %p420
        $region74: #{tpu_custom_call.1} parent=11 // pred_check_branch
          %613 = sbr.rel (%p611) target = $region76
        $region75: #{tpu_custom_call.1} parent=11 // pred_region
          _
        $region76: #{tpu_custom_call.1} parent=11 // pred_fallthru
          _
        // Predicated region
        $region77: #{tpu_custom_call.1} parent=11 // pred_check
          %p614 = pneg %p441
        $region78: #{tpu_custom_call.1} parent=11 // pred_check_branch
          %616 = sbr.rel (%p614) target = $region80
        $region79: #{tpu_custom_call.1} parent=11 // pred_region
          _
        $region80: #{tpu_custom_call.1} parent=11 // pred_fallthru
          _
        // Predicated region
        $region81: #{tpu_custom_call.1} parent=11 // pred_check
          %p617 = pneg %p462
        $region82: #{tpu_custom_call.1} parent=11 // pred_check_branch
          %619 = sbr.rel (%p617) target = $region84
        $region83: #{tpu_custom_call.1} parent=11 // pred_region
          _
        $region84: #{tpu_custom_call.1} parent=11 // pred_fallthru
          _
        // Predicated region
        $region85: #{tpu_custom_call.1} parent=11 // pred_check
          %p620 = pneg %p483
        $region86: #{tpu_custom_call.1} parent=11 // pred_check_branch
          %622 = sbr.rel (%p620) target = $region88
        $region87: #{tpu_custom_call.1} parent=11 // pred_region
          _
        $region88: #{tpu_custom_call.1} parent=11 // pred_fallthru
          _
        // Predicated region
        $region89: #{tpu_custom_call.1} parent=11 // pred_check
          %p623 = pneg %p504
        $region90: #{tpu_custom_call.1} parent=11 // pred_check_branch
          %625 = sbr.rel (%p623) target = $region92
        $region91: #{tpu_custom_call.1} parent=11 // pred_region
          _
        $region92: #{tpu_custom_call.1} parent=11 // pred_fallthru
          _
        // Predicated region
        $region93: #{tpu_custom_call.1} parent=11 // pred_check
          %p626 = pneg %p525
        $region94: #{tpu_custom_call.1} parent=11 // pred_check_branch
          %628 = sbr.rel (%p626) target = $region96
        $region95: #{tpu_custom_call.1} parent=11 // pred_region
          _
        $region96: #{tpu_custom_call.1} parent=11 // pred_fallthru
          _
      $region12: #{tpu_custom_call.1} parent=5 // pred_fallthru
        _
      %p629 = scmp.lt.s32.totalorder %s32, 2
      // Predicated region
      $region97: #{tpu_custom_call.1} parent=5 // pred_check
        %p630 = pneg %p629
      $region98: #{tpu_custom_call.1} parent=5 // pred_check_branch
        %632 = sbr.rel (%p630) target = $region100
      $region99: #{tpu_custom_call.1} parent=5 // pred_region
        // Predicated region
        $region101: #{tpu_custom_call.1} parent=99 // pred_check
          %p633 = pneg %p52
        $region102: #{tpu_custom_call.1} parent=99 // pred_check_branch
          %635 = sbr.rel (%p633) target = $region104
        $region103: #{tpu_custom_call.1} parent=99 // pred_region
          %p636 = scmp.lt.s32.totalorder %s32, 1
          %s637 = scalar_select %p636, %s32, 1
          %s638 = smul.addr %s637, 8
          %s639 = scalar_lea.vmem %s0, %s638
        $region104: #{tpu_custom_call.1} parent=99 // pred_fallthru
          _
        // Predicated region
        $region105: #{tpu_custom_call.1} parent=99 // pred_check
          %p640 = pneg %p78
        $region106: #{tpu_custom_call.1} parent=99 // pred_check_branch
          %642 = sbr.rel (%p640) target = $region108
        $region107: #{tpu_custom_call.1} parent=99 // pred_region
          %p643 = scmp.lt.s32.totalorder %s32, 1
          %s644 = scalar_select %p643, %s32, 1
          %s645 = scalar_lea.vmem %s1, %s644
        $region108: #{tpu_custom_call.1} parent=99 // pred_fallthru
          _
      $region100: #{tpu_custom_call.1} parent=5 // pred_fallthru
        _
      %p646 = scmp.le.s32.totalorder 1, %s32
      %p647 = scmp.lt.s32.totalorder %s32, 3
      %p648 = pnand %p646, %p647
      %p649 = pneg %p648
      // Predicated region
      $region109: #{tpu_custom_call.1} parent=5 // pred_check
        _
      $region110: #{tpu_custom_call.1} parent=5 // pred_check_branch
        %651 = sbr.rel (%p648) target = $region112
      $region111: #{tpu_custom_call.1} parent=5 // pred_region
        %s652 = ssub.s32 %s32, 1
        %p653 = scmp.lt.s32.totalorder %s37, 1
        %s654 = scalar_select %p653, %s37, 1
        %s655 = smul.addr %s654, 8
        %s656 = scalar_lea.vmem %s0, %s655
        %p657 = pneg %p58
        %p658 = pneg %p55
        %p659 = scmp.lt.s32.totalorder %s37, 1
        %s660 = scalar_select %p659, %s37, 1
        %s661 = scalar_lea.vmem %s1, %s660
        %p662 = pneg %p84
        %p663 = pneg %p81
        %p664 = pneg %p105
        %p665 = pneg %p102
        %p666 = pneg %p126
        %p667 = pneg %p123
        %p668 = pneg %p147
        %p669 = pneg %p144
        %p670 = pneg %p168
        %p671 = pneg %p165
        %p672 = pneg %p189
        %p673 = pneg %p186
        %p674 = pneg %p210
        %p675 = pneg %p207
        %p676 = pneg %p231
        %p677 = pneg %p228
        %p678 = pneg %p252
        %p679 = pneg %p249
        %p680 = pneg %p273
        %p681 = pneg %p270
        %p682 = pneg %p294
        %p683 = pneg %p291
        %p684 = pneg %p315
        %p685 = pneg %p312
        %p686 = pneg %p336
        %p687 = pneg %p333
        %p688 = pneg %p357
        %p689 = pneg %p354
        %p690 = pneg %p378
        %p691 = pneg %p375
        %p692 = pneg %p399
        %p693 = pneg %p396
        %p694 = pneg %p420
        %p695 = pneg %p417
        %p696 = pneg %p441
        %p697 = pneg %p438
        %p698 = pneg %p462
        %p699 = pneg %p459
        %p700 = pneg %p483
        %p701 = pneg %p480
        %p702 = pneg %p504
        %p703 = pneg %p501
        %p704 = pneg %p525
        %p705 = pneg %p522
        %p706 = pneg %p551
        %p707 = pneg %p548
        %s708 = sand.u32 %s538, 1
        %s709 = scalar_lea.sflag [#allocation3], %s708
        %s710 = sand.u32 %s538, 1
        %s711 = scalar_lea.vmem [#allocation2], %s710
        %p712 = scmp.lt.s32.totalorder %s37, 1
        %s713 = scalar_select %p712, %s37, 1
        %s714 = smul.addr %s713, 8
        %s715 = scalar_lea.vmem %s0, %s714
        %p716 = scmp.lt.s32.totalorder %s37, 1
        %s717 = scalar_select %p716, %s37, 1
        %s718 = scalar_lea.vmem %s1, %s717
        %v719 = vld [vmem:[%s715] sm:$0xff]
        %v720 = vld [vmem:[%s718] sm:$0x1]
        %v721 = vld [vmem:[%s2] sm:$0xff]
        %v722 = vld [vmem:[%s3] sm:$0xff]
        %v723 = vld [vmem:[%s4] sm:$0xff]
        %v724 = vld [vmem:[%s4 + $0x8] sm:$0xff]
        %v725 = vld [vmem:[%s4 + $0x10] sm:$0xff]
        %v726 = vld [vmem:[%s4 + $0x18] sm:$0xff]
        %v727 = vld [vmem:[%s5] sm:$0x1]
        %v728 = vld [vmem:[%s6] sm:$0x1]
        %vm729 = vcmask 261120
        %v730 = vsel %vm729, %v719, 0.0
        %731 = vadd.xlane.f32.xlu0 %v730
        %v732 = vpop.xlane.xlu0 %731
        %v733 = vrcp.pop 32.0
        %v734 = vmul.f32 32.0, %v733
        %v735 = vsub.f32 1.0, %v734
        %v736 = vmul.f32 %v733, %v735
        %v737 = vadd.f32 %v733, %v736
        %vm738 = vweird.f32 %v733
        %v739 = vsel %vm738, %v733, %v737
        %v740 = vmul.f32 %v732, %v739
        %v741 = vsub.f32 %v719, %v740
        %v742 = vmul.f32 %v741, %v741
        %v743 = vsel %vm729, %v742, 0.0
        %744 = vadd.xlane.f32.xlu0 %v743
        %v745 = vpop.xlane.xlu0 %744
        %v746 = vmul.f32 %v745, %v739
        %v747 = vadd.f32 %v746, 1e-05
        %v748 = vrsqrt.pop %v747
        %v749 = vmul.f32 %v748, %v747
        %v750 = vmul.f32 %v749, %v748
        %v751 = vmul.f32 0.5, %v750
        %v752 = vsub.f32 1.5, %v751
        %v753 = vmul.f32 %v748, %v752
        %vm754 = vweird.f32 %v747
        %vm755 = vweird.f32 %v748
        %vm756 = vmor %vm754, %vm755
        %v757 = vsel %vm756, %v748, %v753
        %v758 = vmul.f32 %v741, %v757
        %v760 = vperm.slane %v727, 0
        %v762 = vmul.f32 %v758, %v760
        %v764 = vperm.slane %v728, 0
        %v766 = vadd.f32 %v762, %v764
        %v767 = vld [vmem:[%s7] sm:$0xff]
        %v768 = vld [vmem:[%s7 + $0x8] sm:$0xff]
        %v769 = vld [vmem:[%s7 + $0x10] sm:$0xff]
        %v770 = vld [vmem:[%s7 + $0x18] sm:$0xff]
        %v771 = vld [vmem:[%s8] sm:$0x1]
        %v773 = vperm.slane %v771, 0
        %v776 = vsel %vm729, %v766, 0
        %778 = vmatpush.msra.mxu0 0.0
        %779 = vmatpush.msra.mxu0 0.0
        %780 = vmatpush.msra.mxu0 0.0
        %781 = vmatpush.msra.mxu0 0.0
        %782 = vmatpush.msra.mxu0 0.0
        %783 = vmatpush.msra.mxu0 0.0
        %784 = vmatpush.msra.mxu0 0.0
        %785 = vmatpush.msra.mxu0 0.0
        %786 = vmatpush.msra.mxu0 0.0
        %787 = vmatpush.msra.mxu0 0.0
        %788 = vmatpush.msra.mxu0 0.0
        %789 = vmatpush.msra.mxu0 0.0
        %790 = vmatpush.msra.mxu0 %v770
        %791 = vmatpush.msra.mxu0 %v769
        %792 = vmatpush.msra.mxu0 %v768
        %793 = vmatpush.msra.mxu0 %v767
        %794 = vmatmul.f32.gmra.mxu0 %v776
        %v795 = vpop.f32.mrf.mxu0
        %v796 = vadd.f32 %v773, %v795
        %797 = vdwg.mxu0
        %v798 = vmul.f32 %v796, %v721
        %v800 = vsel %vm729, %v796, 0
        %802 = vmatpush.msra.mxu0 0.0
        %803 = vmatpush.msra.mxu0 0.0
        %804 = vmatpush.msra.mxu0 0.0
        %805 = vmatpush.msra.mxu0 0.0
        %806 = vmatpush.msra.mxu0 0.0
        %807 = vmatpush.msra.mxu0 0.0
        %808 = vmatpush.msra.mxu0 0.0
        %809 = vmatpush.msra.mxu0 0.0
        %810 = vmatpush.msra.mxu0 0.0
        %811 = vmatpush.msra.mxu0 0.0
        %812 = vmatpush.msra.mxu0 0.0
        %813 = vmatpush.msra.mxu0 0.0
        %814 = vmatpush.msra.mxu0 %v726
        %815 = vmatpush.msra.mxu0 %v725
        %816 = vmatpush.msra.mxu0 %v724
        %817 = vmatpush.msra.mxu0 %v723
        %818 = vmatmul.f32.gmra.mxu0 %v800
        %v819 = vpop.f32.mrf.mxu0
        %v820 = vadd.f32 0.0, %v819
        %821 = vdwg.mxu0
        %v822 = vmul.f32 %v820, %v722
        %v823 = vadd.f32 %v798, %v822
        %825 = vrot.lane.b32.xlu0 %v721, 32
        %v826 = vpop.permute.xlu0 %825
        %v828 = vmul.f32 %v796, %v826
        %829 = vrot.lane.b32.xlu0 %v796, 96
        %v830 = vpop.permute.xlu0 %829
        %v831 = vsel %vm729, %v830, 0
        %833 = vmatpush.msra.mxu0 0.0
        %834 = vmatpush.msra.mxu0 0.0
        %835 = vmatpush.msra.mxu0 0.0
        %836 = vmatpush.msra.mxu0 0.0
        %837 = vmatpush.msra.mxu0 0.0
        %838 = vmatpush.msra.mxu0 0.0
        %839 = vmatpush.msra.mxu0 0.0
        %840 = vmatpush.msra.mxu0 0.0
        %841 = vmatpush.msra.mxu0 0.0
        %842 = vmatpush.msra.mxu0 0.0
        %843 = vmatpush.msra.mxu0 0.0
        %844 = vmatpush.msra.mxu0 0.0
        %845 = vmatpush.msra.mxu0 %v726
        %846 = vmatpush.msra.mxu0 %v725
        %847 = vmatpush.msra.mxu0 %v724
        %848 = vmatpush.msra.mxu0 %v723
        %849 = vmatmul.f32.gmra.mxu0 %v831
        %v850 = vpop.f32.mrf.mxu0
        %v851 = vadd.f32 0.0, %v850
        %852 = vdwg.mxu0
        %v853 = vmul.f32 %v851, %v722
        %855 = vrot.lane.b32.xlu0 %v853, 32
        %v856 = vpop.permute.xlu0 %855
        %v858 = vadd.f32 %v828, %v856
        %v860 = vperm.slane %v720, 0
        %863 = vrot.lane.b32.xlu0 %v858, 96
        %v864 = vpop.permute.xlu0 %863
        %vm865 = vcmask 64512
        %v867 = vsel %vm865, %v823, 0
        %v869 = vsel %vm865, %v864, 0
        %871 = vmatpush.xpose.msra.mxu0 0.0
        %872 = vmatpush.xpose.msra.mxu0 0.0
        %873 = vmatpush.xpose.msra.mxu0 0.0
        %874 = vmatpush.xpose.msra.mxu0 0.0
        %875 = vmatpush.xpose.msra.mxu0 0.0
        %876 = vmatpush.xpose.msra.mxu0 0.0
        %877 = vmatpush.xpose.msra.mxu0 0.0
        %878 = vmatpush.xpose.msra.mxu0 0.0
        %879 = vmatpush.xpose.msra.mxu0 0.0
        %880 = vmatpush.xpose.msra.mxu0 0.0
        %881 = vmatpush.xpose.msra.mxu0 0.0
        %882 = vmatpush.xpose.msra.mxu0 0.0
        %883 = vmatpush.xpose.msra.mxu0 0.0
        %884 = vmatpush.xpose.msra.mxu0 0.0
        %885 = vmatpush.xpose.msra.mxu0 0.0
        %886 = vmatpush.xpose.msra.mxu0 %v869
        %887 = vmatmul.f32.gmra.mxu0 %v867
        %v888 = vpop.f32.mrf.mxu0
        %v889 = vadd.f32 %v860, %v888
        %890 = vdwg.mxu0
        %v891 = vsel %vm865, %v889, -inf
        %892 = vmax.xlane.f32.xlu0 %v891
        %v893 = vpop.xlane.xlu0 %892
        %v894 = vsub.f32 %v889, %v893
        %v895 = vmul.f32 %v894, 1.442695
        %v896 = vpow.pop %v895
        %v897 = vsel %vm865, %v896, 0.0
        %898 = vadd.xlane.f32.xlu0 %v897
        %v899 = vpop.xlane.xlu0 %898
        %v900 = vrcp.pop %v899
        %v901 = vmul.f32 %v896, %v900
        %902 = vrot.lane.b32.xlu0 %v796, 64
        %v903 = vpop.permute.xlu0 %902
        %v906 = vsel %vm865, %v901, 0
        %908 = vmatpush.msra.mxu0 0.0
        %909 = vmatpush.msra.mxu0 0.0
        %910 = vmatpush.msra.mxu0 0.0
        %911 = vmatpush.msra.mxu0 0.0
        %912 = vmatpush.msra.mxu0 0.0
        %913 = vmatpush.msra.mxu0 0.0
        %914 = vmatpush.msra.mxu0 0.0
        %915 = vmatpush.msra.mxu0 0.0
        %916 = vmatpush.msra.mxu0 0.0
        %917 = vmatpush.msra.mxu0 0.0
        %918 = vmatpush.msra.mxu0 0.0
        %919 = vmatpush.msra.mxu0 0.0
        %920 = vmatpush.msra.mxu0 0.0
        %921 = vmatpush.msra.mxu0 0.0
        %922 = vmatpush.msra.mxu0 0.0
        %923 = vmatpush.msra.mxu0 %v903
        %924 = vmatmul.f32.gmra.mxu0 %v906
        %v925 = vpop.f32.mrf.mxu0
        %v926 = vadd.f32 0.0, %v925
        %927 = vdwg.mxu0
        %928 = vrot.lane.b32.xlu0 %v823, 120
        %v929 = vpop.permute.xlu0 %928
        %930 = vrot.lane.b32.xlu0 %v858, 88
        %v931 = vpop.permute.xlu0 %930
        %v932 = vsel %vm865, %v929, 0
        %v934 = vsel %vm865, %v931, 0
        %936 = vmatpush.xpose.msra.mxu0 0.0
        %937 = vmatpush.xpose.msra.mxu0 0.0
        %938 = vmatpush.xpose.msra.mxu0 0.0
        %939 = vmatpush.xpose.msra.mxu0 0.0
        %940 = vmatpush.xpose.msra.mxu0 0.0
        %941 = vmatpush.xpose.msra.mxu0 0.0
        %942 = vmatpush.xpose.msra.mxu0 0.0
        %943 = vmatpush.xpose.msra.mxu0 0.0
        %944 = vmatpush.xpose.msra.mxu0 0.0
        %945 = vmatpush.xpose.msra.mxu0 0.0
        %946 = vmatpush.xpose.msra.mxu0 0.0
        %947 = vmatpush.xpose.msra.mxu0 0.0
        %948 = vmatpush.xpose.msra.mxu0 0.0
        %949 = vmatpush.xpose.msra.mxu0 0.0
        %950 = vmatpush.xpose.msra.mxu0 0.0
        %951 = vmatpush.xpose.msra.mxu0 %v934
        %952 = vmatmul.f32.gmra.mxu0 %v932
        %v953 = vpop.f32.mrf.mxu0
        %v954 = vadd.f32 %v860, %v953
        %955 = vdwg.mxu0
        %v956 = vsel %vm865, %v954, -inf
        %957 = vmax.xlane.f32.xlu0 %v956
        %v958 = vpop.xlane.xlu0 %957
        %v959 = vsub.f32 %v954, %v958
        %v960 = vmul.f32 %v959, 1.442695
        %v961 = vpow.pop %v960
        %v962 = vsel %vm865, %v961, 0.0
        %963 = vadd.xlane.f32.xlu0 %v962
        %v964 = vpop.xlane.xlu0 %963
        %v965 = vrcp.pop %v964
        %v966 = vmul.f32 %v961, %v965
        %967 = vrot.lane.b32.xlu0 %v796, 56
        %v968 = vpop.permute.xlu0 %967
        %v971 = vsel %vm865, %v966, 0
        %973 = vmatpush.msra.mxu0 0.0
        %974 = vmatpush.msra.mxu0 0.0
        %975 = vmatpush.msra.mxu0 0.0
        %976 = vmatpush.msra.mxu0 0.0
        %977 = vmatpush.msra.mxu0 0.0
        %978 = vmatpush.msra.mxu0 0.0
        %979 = vmatpush.msra.mxu0 0.0
        %980 = vmatpush.msra.mxu0 0.0
        %981 = vmatpush.msra.mxu0 0.0
        %982 = vmatpush.msra.mxu0 0.0
        %983 = vmatpush.msra.mxu0 0.0
        %984 = vmatpush.msra.mxu0 0.0
        %985 = vmatpush.msra.mxu0 0.0
        %986 = vmatpush.msra.mxu0 0.0
        %987 = vmatpush.msra.mxu0 0.0
        %988 = vmatpush.msra.mxu0 %v968
        %989 = vmatmul.f32.gmra.mxu0 %v971
        %v990 = vpop.f32.mrf.mxu0
        %v991 = vadd.f32 0.0, %v990
        %992 = vdwg.mxu0
        %993 = vrot.lane.b32.xlu0 %v823, 112
        %v994 = vpop.permute.xlu0 %993
        %995 = vrot.lane.b32.xlu0 %v858, 80
        %v996 = vpop.permute.xlu0 %995
        %v997 = vsel %vm865, %v994, 0
        %v999 = vsel %vm865, %v996, 0
        %1001 = vmatpush.xpose.msra.mxu0 0.0
        %1002 = vmatpush.xpose.msra.mxu0 0.0
        %1003 = vmatpush.xpose.msra.mxu0 0.0
        %1004 = vmatpush.xpose.msra.mxu0 0.0
        %1005 = vmatpush.xpose.msra.mxu0 0.0
        %1006 = vmatpush.xpose.msra.mxu0 0.0
        %1007 = vmatpush.xpose.msra.mxu0 0.0
        %1008 = vmatpush.xpose.msra.mxu0 0.0
        %1009 = vmatpush.xpose.msra.mxu0 0.0
        %1010 = vmatpush.xpose.msra.mxu0 0.0
        %1011 = vmatpush.xpose.msra.mxu0 0.0
        %1012 = vmatpush.xpose.msra.mxu0 0.0
        %1013 = vmatpush.xpose.msra.mxu0 0.0
        %1014 = vmatpush.xpose.msra.mxu0 0.0
        %1015 = vmatpush.xpose.msra.mxu0 0.0
        %1016 = vmatpush.xpose.msra.mxu0 %v999
        %1017 = vmatmul.f32.gmra.mxu0 %v997
        %v1018 = vpop.f32.mrf.mxu0
        %v1019 = vadd.f32 %v860, %v1018
        %1020 = vdwg.mxu0
        %v1021 = vsel %vm865, %v1019, -inf
        %1022 = vmax.xlane.f32.xlu0 %v1021
        %v1023 = vpop.xlane.xlu0 %1022
        %v1024 = vsub.f32 %v1019, %v1023
        %v1025 = vmul.f32 %v1024, 1.442695
        %v1026 = vpow.pop %v1025
        %v1027 = vsel %vm865, %v1026, 0.0
        %1028 = vadd.xlane.f32.xlu0 %v1027
        %v1029 = vpop.xlane.xlu0 %1028
        %v1030 = vrcp.pop %v1029
        %v1031 = vmul.f32 %v1026, %v1030
        %1032 = vrot.lane.b32.xlu0 %v796, 48
        %v1033 = vpop.permute.xlu0 %1032
        %v1036 = vsel %vm865, %v1031, 0
        %1038 = vmatpush.msra.mxu0 0.0
        %1039 = vmatpush.msra.mxu0 0.0
        %1040 = vmatpush.msra.mxu0 0.0
        %1041 = vmatpush.msra.mxu0 0.0
        %1042 = vmatpush.msra.mxu0 0.0
        %1043 = vmatpush.msra.mxu0 0.0
        %1044 = vmatpush.msra.mxu0 0.0
        %1045 = vmatpush.msra.mxu0 0.0
        %1046 = vmatpush.msra.mxu0 0.0
        %1047 = vmatpush.msra.mxu0 0.0
        %1048 = vmatpush.msra.mxu0 0.0
        %1049 = vmatpush.msra.mxu0 0.0
        %1050 = vmatpush.msra.mxu0 0.0
        %1051 = vmatpush.msra.mxu0 0.0
        %1052 = vmatpush.msra.mxu0 0.0
        %1053 = vmatpush.msra.mxu0 %v1033
        %1054 = vmatmul.f32.gmra.mxu0 %v1036
        %v1055 = vpop.f32.mrf.mxu0
        %v1056 = vadd.f32 0.0, %v1055
        %1057 = vdwg.mxu0
        %1058 = vrot.lane.b32.xlu0 %v823, 104
        %v1059 = vpop.permute.xlu0 %1058
        %1060 = vrot.lane.b32.xlu0 %v858, 72
        %v1061 = vpop.permute.xlu0 %1060
        %v1062 = vsel %vm865, %v1059, 0
        %v1064 = vsel %vm865, %v1061, 0
        %1066 = vmatpush.xpose.msra.mxu0 0.0
        %1067 = vmatpush.xpose.msra.mxu0 0.0
        %1068 = vmatpush.xpose.msra.mxu0 0.0
        %1069 = vmatpush.xpose.msra.mxu0 0.0
        %1070 = vmatpush.xpose.msra.mxu0 0.0
        %1071 = vmatpush.xpose.msra.mxu0 0.0
        %1072 = vmatpush.xpose.msra.mxu0 0.0
        %1073 = vmatpush.xpose.msra.mxu0 0.0
        %1074 = vmatpush.xpose.msra.mxu0 0.0
        %1075 = vmatpush.xpose.msra.mxu0 0.0
        %1076 = vmatpush.xpose.msra.mxu0 0.0
        %1077 = vmatpush.xpose.msra.mxu0 0.0
        %1078 = vmatpush.xpose.msra.mxu0 0.0
        %1079 = vmatpush.xpose.msra.mxu0 0.0
        %1080 = vmatpush.xpose.msra.mxu0 0.0
        %1081 = vmatpush.xpose.msra.mxu0 %v1064
        %1082 = vmatmul.f32.gmra.mxu0 %v1062
        %v1083 = vpop.f32.mrf.mxu0
        %v1084 = vadd.f32 %v860, %v1083
        %1085 = vdwg.mxu0
        %v1086 = vsel %vm865, %v1084, -inf
        %1087 = vmax.xlane.f32.xlu0 %v1086
        %v1088 = vpop.xlane.xlu0 %1087
        %v1089 = vsub.f32 %v1084, %v1088
        %v1090 = vmul.f32 %v1089, 1.442695
        %v1091 = vpow.pop %v1090
        %v1092 = vsel %vm865, %v1091, 0.0
        %1093 = vadd.xlane.f32.xlu0 %v1092
        %v1094 = vpop.xlane.xlu0 %1093
        %v1095 = vrcp.pop %v1094
        %v1096 = vmul.f32 %v1091, %v1095
        %1097 = vrot.lane.b32.xlu0 %v796, 40
        %v1098 = vpop.permute.xlu0 %1097
        %v1101 = vsel %vm865, %v1096, 0
        %1103 = vmatpush.msra.mxu0 0.0
        %1104 = vmatpush.msra.mxu0 0.0
        %1105 = vmatpush.msra.mxu0 0.0
        %1106 = vmatpush.msra.mxu0 0.0
        %1107 = vmatpush.msra.mxu0 0.0
        %1108 = vmatpush.msra.mxu0 0.0
        %1109 = vmatpush.msra.mxu0 0.0
        %1110 = vmatpush.msra.mxu0 0.0
        %1111 = vmatpush.msra.mxu0 0.0
        %1112 = vmatpush.msra.mxu0 0.0
        %1113 = vmatpush.msra.mxu0 0.0
        %1114 = vmatpush.msra.mxu0 0.0
        %1115 = vmatpush.msra.mxu0 0.0
        %1116 = vmatpush.msra.mxu0 0.0
        %1117 = vmatpush.msra.mxu0 0.0
        %1118 = vmatpush.msra.mxu0 %v1098
        %1119 = vmatmul.f32.gmra.mxu0 %v1101
        %v1120 = vpop.f32.mrf.mxu0
        %v1121 = vadd.f32 0.0, %v1120
        %1122 = vdwg.mxu0
        %1124 = vrot.lane.b32.xlu0 %v991, 8
        %v1125 = vpop.permute.xlu0 %1124
        %1128 = vrot.lane.b32.xlu0 %v1056, 16
        %v1129 = vpop.permute.xlu0 %1128
        %1132 = vrot.lane.b32.xlu0 %v1121, 24
        %v1133 = vpop.permute.xlu0 %1132
        %v1135 = vsel %vm865, %v926, %v1125
        %vm1136 = vcmask 130048
        %v1137 = vsel %vm1136, %v1135, %v1129
        %vm1138 = vcmask 195584
        %v1139 = vsel %vm1138, %v1137, %v1133
        %v1140 = vld [vmem:[%s9] sm:$0xff]
        %v1141 = vld [vmem:[%s9 + $0x8] sm:$0xff]
        %v1142 = vld [vmem:[%s9 + $0x10] sm:$0xff]
        %v1143 = vld [vmem:[%s9 + $0x18] sm:$0xff]
        %v1145 = vsel %vm729, %v1139, 0
        %1147 = vmatpush.msra.mxu0 0.0
        %1148 = vmatpush.msra.mxu0 0.0
        %1149 = vmatpush.msra.mxu0 0.0
        %1150 = vmatpush.msra.mxu0 0.0
        %1151 = vmatpush.msra.mxu0 0.0
        %1152 = vmatpush.msra.mxu0 0.0
        %1153 = vmatpush.msra.mxu0 0.0
        %1154 = vmatpush.msra.mxu0 0.0
        %1155 = vmatpush.msra.mxu0 0.0
        %1156 = vmatpush.msra.mxu0 0.0
        %1157 = vmatpush.msra.mxu0 0.0
        %1158 = vmatpush.msra.mxu0 0.0
        %1159 = vmatpush.msra.mxu0 %v1143
        %1160 = vmatpush.msra.mxu0 %v1142
        %1161 = vmatpush.msra.mxu0 %v1141
        %1162 = vmatpush.msra.mxu0 %v1140
        %1163 = vmatmul.f32.gmra.mxu0 %v1145
        %v1164 = vpop.f32.mrf.mxu0
        %v1165 = vadd.f32 0.0, %v1164
        %1166 = vdwg.mxu0
        %v1167 = vadd.f32 %v719, %v1165
        %v1168 = vld [vmem:[%s10] sm:$0x1]
        %v1170 = vperm.slane %v1168, 0
        %v1172 = vadd.f32 %v1167, %v1170
        %v1173 = vld [vmem:[%s11] sm:$0x1]
        %v1174 = vld [vmem:[%s12] sm:$0x1]
        %v1175 = vsel %vm729, %v1172, 0.0
        %1176 = vadd.xlane.f32.xlu0 %v1175
        %v1177 = vpop.xlane.xlu0 %1176
        %v1178 = vmul.f32 %v1177, %v739
        %v1179 = vsub.f32 %v1172, %v1178
        %v1180 = vmul.f32 %v1179, %v1179
        %v1181 = vsel %vm729, %v1180, 0.0
        %1182 = vadd.xlane.f32.xlu0 %v1181
        %v1183 = vpop.xlane.xlu0 %1182
        %v1184 = vmul.f32 %v1183, %v739
        %v1185 = vadd.f32 %v1184, 1e-05
        %v1186 = vrsqrt.pop %v1185
        %v1187 = vmul.f32 %v1186, %v1185
        %v1188 = vmul.f32 %v1187, %v1186
        %v1189 = vmul.f32 0.5, %v1188
        %v1190 = vsub.f32 1.5, %v1189
        %v1191 = vmul.f32 %v1186, %v1190
        %vm1192 = vweird.f32 %v1185
        %vm1193 = vweird.f32 %v1186
        %vm1194 = vmor %vm1192, %vm1193
        %v1195 = vsel %vm1194, %v1186, %v1191
        %v1196 = vmul.f32 %v1179, %v1195
        %v1198 = vperm.slane %v1173, 0
        %v1200 = vmul.f32 %v1196, %v1198
        %v1202 = vperm.slane %v1174, 0
        %v1204 = vadd.f32 %v1200, %v1202
        %v1205 = vld [vmem:[%s13] sm:$0xff]
        %v1206 = vld [vmem:[%s13 + $0x8] sm:$0xff]
        %v1207 = vld [vmem:[%s13 + $0x10] sm:$0xff]
        %v1208 = vld [vmem:[%s13 + $0x18] sm:$0xff]
        %v1209 = vld [vmem:[%s14] sm:$0x1]
        %v1211 = vperm.slane %v1209, 0
        %v1214 = vsel %vm729, %v1204, 0
        %1216 = vmatpush.msra.mxu0 0.0
        %1217 = vmatpush.msra.mxu0 0.0
        %1218 = vmatpush.msra.mxu0 0.0
        %1219 = vmatpush.msra.mxu0 0.0
        %1220 = vmatpush.msra.mxu0 0.0
        %1221 = vmatpush.msra.mxu0 0.0
        %1222 = vmatpush.msra.mxu0 0.0
        %1223 = vmatpush.msra.mxu0 0.0
        %1224 = vmatpush.msra.mxu0 0.0
        %1225 = vmatpush.msra.mxu0 0.0
        %1226 = vmatpush.msra.mxu0 0.0
        %1227 = vmatpush.msra.mxu0 0.0
        %1228 = vmatpush.msra.mxu0 %v1208
        %1229 = vmatpush.msra.mxu0 %v1207
        %1230 = vmatpush.msra.mxu0 %v1206
        %1231 = vmatpush.msra.mxu0 %v1205
        %1232 = vmatmul.f32.gmra.mxu0 %v1214
        %v1233 = vpop.f32.mrf.mxu0
        %v1234 = vadd.f32 %v1211, %v1233
        %1235 = vdwg.mxu0
        %v1236 = vmul.f32 %v1234, 0.5
        %v1237 = vmul.f32 %v1234, 0.044715
        %v1238 = vmul.f32 %v1237, %v1234
        %v1239 = vmul.f32 %v1238, %v1234
        %v1240 = vadd.f32 %v1234, %v1239
        %v1241 = vmul.f32 %v1240, 0.7978846
        %v1242 = vtanh.pop %v1241
        %v1243 = vadd.f32 %v1242, 1.0
        %v1244 = vmul.f32 %v1236, %v1243
        %v1245 = vld [vmem:[%s15] sm:$0xff]
        %v1246 = vld [vmem:[%s15 + $0x8] sm:$0xff]
        %v1247 = vld [vmem:[%s15 + $0x10] sm:$0xff]
        %v1248 = vld [vmem:[%s15 + $0x18] sm:$0xff]
        %v1249 = vld [vmem:[%s15 + $0x20] sm:$0xff]
        %v1250 = vld [vmem:[%s15 + $0x28] sm:$0xff]
        %v1251 = vld [vmem:[%s15 + $0x30] sm:$0xff]
        %v1252 = vld [vmem:[%s15 + $0x38] sm:$0xff]
        %v1253 = vld [vmem:[%s15 + $0x40] sm:$0xff]
        %v1254 = vld [vmem:[%s15 + $0x48] sm:$0xff]
        %v1255 = vld [vmem:[%s15 + $0x50] sm:$0xff]
        %v1256 = vld [vmem:[%s15 + $0x58] sm:$0xff]
        %v1257 = vld [vmem:[%s15 + $0x60] sm:$0xff]
        %v1258 = vld [vmem:[%s15 + $0x68] sm:$0xff]
        %v1259 = vld [vmem:[%s15 + $0x70] sm:$0xff]
        %v1260 = vld [vmem:[%s15 + $0x78] sm:$0xff]
        %1261 = vmatpush.msra.mxu0 %v1260
        %1262 = vmatpush.msra.mxu0 %v1259
        %1263 = vmatpush.msra.mxu0 %v1258
        %1264 = vmatpush.msra.mxu0 %v1257
        %1265 = vmatpush.msra.mxu0 %v1256
        %1266 = vmatpush.msra.mxu0 %v1255
        %1267 = vmatpush.msra.mxu0 %v1254
        %1268 = vmatpush.msra.mxu0 %v1253
        %1269 = vmatpush.msra.mxu0 %v1252
        %1270 = vmatpush.msra.mxu0 %v1251
        %1271 = vmatpush.msra.mxu0 %v1250
        %1272 = vmatpush.msra.mxu0 %v1249
        %1273 = vmatpush.msra.mxu0 %v1248
        %1274 = vmatpush.msra.mxu0 %v1247
        %1275 = vmatpush.msra.mxu0 %v1246
        %1276 = vmatpush.msra.mxu0 %v1245
        %1277 = vmatmul.f32.gmra.mxu0 %v1244
        %v1278 = vpop.f32.mrf.mxu0
        %v1279 = vadd.f32 0.0, %v1278
        %1280 = vdwg.mxu0
        %v1281 = vadd.f32 %v1172, %v1279
        %v1282 = vld [vmem:[%s16] sm:$0x1]
        %v1284 = vperm.slane %v1282, 0
        %v1286 = vadd.f32 %v1281, %v1284
        %s1287 = scalar_lea.vmem %s5, 1
        %v1288 = vld [vmem:[%s1287] sm:$0x1]
        %s1289 = scalar_lea.vmem %s6, 1
        %v1290 = vld [vmem:[%s1289] sm:$0x1]
        %v1291 = vsel %vm729, %v1286, 0.0
        %1292 = vadd.xlane.f32.xlu0 %v1291
        %v1293 = vpop.xlane.xlu0 %1292
        %v1294 = vmul.f32 %v1293, %v739
        %v1295 = vsub.f32 %v1286, %v1294
        %v1296 = vmul.f32 %v1295, %v1295
        %v1297 = vsel %vm729, %v1296, 0.0
        %1298 = vadd.xlane.f32.xlu0 %v1297
        %v1299 = vpop.xlane.xlu0 %1298
        %v1300 = vmul.f32 %v1299, %v739
        %v1301 = vadd.f32 %v1300, 1e-05
        %v1302 = vrsqrt.pop %v1301
        %v1303 = vmul.f32 %v1302, %v1301
        %v1304 = vmul.f32 %v1303, %v1302
        %v1305 = vmul.f32 0.5, %v1304
        %v1306 = vsub.f32 1.5, %v1305
        %v1307 = vmul.f32 %v1302, %v1306
        %vm1308 = vweird.f32 %v1301
        %vm1309 = vweird.f32 %v1302
        %vm1310 = vmor %vm1308, %vm1309
        %v1311 = vsel %vm1310, %v1302, %v1307
        %v1312 = vmul.f32 %v1295, %v1311
        %v1314 = vperm.slane %v1288, 0
        %v1316 = vmul.f32 %v1312, %v1314
        %v1318 = vperm.slane %v1290, 0
        %v1320 = vadd.f32 %v1316, %v1318
        %s1321 = scalar_lea.vmem %s7, 32
        %v1322 = vld [vmem:[%s1321] sm:$0xff]
        %v1323 = vld [vmem:[%s1321 + $0x8] sm:$0xff]
        %v1324 = vld [vmem:[%s1321 + $0x10] sm:$0xff]
        %v1325 = vld [vmem:[%s1321 + $0x18] sm:$0xff]
        %s1326 = scalar_lea.vmem %s8, 1
        %v1327 = vld [vmem:[%s1326] sm:$0x1]
        %v1329 = vperm.slane %v1327, 0
        %v1332 = vsel %vm729, %v1320, 0
        %1334 = vmatpush.msra.mxu0 0.0
        %1335 = vmatpush.msra.mxu0 0.0
        %1336 = vmatpush.msra.mxu0 0.0
        %1337 = vmatpush.msra.mxu0 0.0
        %1338 = vmatpush.msra.mxu0 0.0
        %1339 = vmatpush.msra.mxu0 0.0
        %1340 = vmatpush.msra.mxu0 0.0
        %1341 = vmatpush.msra.mxu0 0.0
        %1342 = vmatpush.msra.mxu0 0.0
        %1343 = vmatpush.msra.mxu0 0.0
        %1344 = vmatpush.msra.mxu0 0.0
        %1345 = vmatpush.msra.mxu0 0.0
        %1346 = vmatpush.msra.mxu0 %v1325
        %1347 = vmatpush.msra.mxu0 %v1324
        %1348 = vmatpush.msra.mxu0 %v1323
        %1349 = vmatpush.msra.mxu0 %v1322
        %1350 = vmatmul.f32.gmra.mxu0 %v1332
        %v1351 = vpop.f32.mrf.mxu0
        %v1352 = vadd.f32 %v1329, %v1351
        %1353 = vdwg.mxu0
        %v1354 = vmul.f32 %v1352, %v721
        %v1356 = vsel %vm729, %v1352, 0
        %1358 = vmatpush.msra.mxu0 0.0
        %1359 = vmatpush.msra.mxu0 0.0
        %1360 = vmatpush.msra.mxu0 0.0
        %1361 = vmatpush.msra.mxu0 0.0
        %1362 = vmatpush.msra.mxu0 0.0
        %1363 = vmatpush.msra.mxu0 0.0
        %1364 = vmatpush.msra.mxu0 0.0
        %1365 = vmatpush.msra.mxu0 0.0
        %1366 = vmatpush.msra.mxu0 0.0
        %1367 = vmatpush.msra.mxu0 0.0
        %1368 = vmatpush.msra.mxu0 0.0
        %1369 = vmatpush.msra.mxu0 0.0
        %1370 = vmatpush.msra.mxu0 %v726
        %1371 = vmatpush.msra.mxu0 %v725
        %1372 = vmatpush.msra.mxu0 %v724
        %1373 = vmatpush.msra.mxu0 %v723
        %1374 = vmatmul.f32.gmra.mxu0 %v1356
        %v1375 = vpop.f32.mrf.mxu0
        %v1376 = vadd.f32 0.0, %v1375
        %1377 = vdwg.mxu0
        %v1378 = vmul.f32 %v1376, %v722
        %v1379 = vadd.f32 %v1354, %v1378
        %v1380 = vmul.f32 %v1352, %v826
        %1381 = vrot.lane.b32.xlu0 %v1352, 96
        %v1382 = vpop.permute.xlu0 %1381
        %v1383 = vsel %vm729, %v1382, 0
        %1385 = vmatpush.msra.mxu0 0.0
        %1386 = vmatpush.msra.mxu0 0.0
        %1387 = vmatpush.msra.mxu0 0.0
        %1388 = vmatpush.msra.mxu0 0.0
        %1389 = vmatpush.msra.mxu0 0.0
        %1390 = vmatpush.msra.mxu0 0.0
        %1391 = vmatpush.msra.mxu0 0.0
        %1392 = vmatpush.msra.mxu0 0.0
        %1393 = vmatpush.msra.mxu0 0.0
        %1394 = vmatpush.msra.mxu0 0.0
        %1395 = vmatpush.msra.mxu0 0.0
        %1396 = vmatpush.msra.mxu0 0.0
        %1397 = vmatpush.msra.mxu0 %v726
        %1398 = vmatpush.msra.mxu0 %v725
        %1399 = vmatpush.msra.mxu0 %v724
        %1400 = vmatpush.msra.mxu0 %v723
        %1401 = vmatmul.f32.gmra.mxu0 %v1383
        %v1402 = vpop.f32.mrf.mxu0
        %v1403 = vadd.f32 0.0, %v1402
        %1404 = vdwg.mxu0
        %v1405 = vmul.f32 %v1403, %v722
        %1407 = vrot.lane.b32.xlu0 %v1405, 32
        %v1408 = vpop.permute.xlu0 %1407
        %v1410 = vadd.f32 %v1380, %v1408
        %1412 = vrot.lane.b32.xlu0 %v1410, 96
        %v1413 = vpop.permute.xlu0 %1412
        %v1415 = vsel %vm865, %v1379, 0
        %v1417 = vsel %vm865, %v1413, 0
        %1419 = vmatpush.xpose.msra.mxu0 0.0
        %1420 = vmatpush.xpose.msra.mxu0 0.0
        %1421 = vmatpush.xpose.msra.mxu0 0.0
        %1422 = vmatpush.xpose.msra.mxu0 0.0
        %1423 = vmatpush.xpose.msra.mxu0 0.0
        %1424 = vmatpush.xpose.msra.mxu0 0.0
        %1425 = vmatpush.xpose.msra.mxu0 0.0
        %1426 = vmatpush.xpose.msra.mxu0 0.0
        %1427 = vmatpush.xpose.msra.mxu0 0.0
        %1428 = vmatpush.xpose.msra.mxu0 0.0
        %1429 = vmatpush.xpose.msra.mxu0 0.0
        %1430 = vmatpush.xpose.msra.mxu0 0.0
        %1431 = vmatpush.xpose.msra.mxu0 0.0
        %1432 = vmatpush.xpose.msra.mxu0 0.0
        %1433 = vmatpush.xpose.msra.mxu0 0.0
        %1434 = vmatpush.xpose.msra.mxu0 %v1417
        %1435 = vmatmul.f32.gmra.mxu0 %v1415
        %v1436 = vpop.f32.mrf.mxu0
        %v1437 = vadd.f32 %v860, %v1436
        %1438 = vdwg.mxu0
        %v1439 = vsel %vm865, %v1437, -inf
        %1440 = vmax.xlane.f32.xlu0 %v1439
        %v1441 = vpop.xlane.xlu0 %1440
        %v1442 = vsub.f32 %v1437, %v1441
        %v1443 = vmul.f32 %v1442, 1.442695
        %v1444 = vpow.pop %v1443
        %v1445 = vsel %vm865, %v1444, 0.0
        %1446 = vadd.xlane.f32.xlu0 %v1445
        %v1447 = vpop.xlane.xlu0 %1446
        %v1448 = vrcp.pop %v1447
        %v1449 = vmul.f32 %v1444, %v1448
        %1450 = vrot.lane.b32.xlu0 %v1352, 64
        %v1451 = vpop.permute.xlu0 %1450
        %v1454 = vsel %vm865, %v1449, 0
        %1456 = vmatpush.msra.mxu0 0.0
        %1457 = vmatpush.msra.mxu0 0.0
        %1458 = vmatpush.msra.mxu0 0.0
        %1459 = vmatpush.msra.mxu0 0.0
        %1460 = vmatpush.msra.mxu0 0.0
        %1461 = vmatpush.msra.mxu0 0.0
        %1462 = vmatpush.msra.mxu0 0.0
        %1463 = vmatpush.msra.mxu0 0.0
        %1464 = vmatpush.msra.mxu0 0.0
        %1465 = vmatpush.msra.mxu0 0.0
        %1466 = vmatpush.msra.mxu0 0.0
        %1467 = vmatpush.msra.mxu0 0.0
        %1468 = vmatpush.msra.mxu0 0.0
        %1469 = vmatpush.msra.mxu0 0.0
        %1470 = vmatpush.msra.mxu0 0.0
        %1471 = vmatpush.msra.mxu0 %v1451
        %1472 = vmatmul.f32.gmra.mxu0 %v1454
        %v1473 = vpop.f32.mrf.mxu0
        %v1474 = vadd.f32 0.0, %v1473
        %1475 = vdwg.mxu0
        %1476 = vrot.lane.b32.xlu0 %v1379, 120
        %v1477 = vpop.permute.xlu0 %1476
        %1478 = vrot.lane.b32.xlu0 %v1410, 88
        %v1479 = vpop.permute.xlu0 %1478
        %v1480 = vsel %vm865, %v1477, 0
        %v1482 = vsel %vm865, %v1479, 0
        %1484 = vmatpush.xpose.msra.mxu0 0.0
        %1485 = vmatpush.xpose.msra.mxu0 0.0
        %1486 = vmatpush.xpose.msra.mxu0 0.0
        %1487 = vmatpush.xpose.msra.mxu0 0.0
        %1488 = vmatpush.xpose.msra.mxu0 0.0
        %1489 = vmatpush.xpose.msra.mxu0 0.0
        %1490 = vmatpush.xpose.msra.mxu0 0.0
        %1491 = vmatpush.xpose.msra.mxu0 0.0
        %1492 = vmatpush.xpose.msra.mxu0 0.0
        %1493 = vmatpush.xpose.msra.mxu0 0.0
        %1494 = vmatpush.xpose.msra.mxu0 0.0
        %1495 = vmatpush.xpose.msra.mxu0 0.0
        %1496 = vmatpush.xpose.msra.mxu0 0.0
        %1497 = vmatpush.xpose.msra.mxu0 0.0
        %1498 = vmatpush.xpose.msra.mxu0 0.0
        %1499 = vmatpush.xpose.msra.mxu0 %v1482
        %1500 = vmatmul.f32.gmra.mxu0 %v1480
        %v1501 = vpop.f32.mrf.mxu0
        %v1502 = vadd.f32 %v860, %v1501
        %1503 = vdwg.mxu0
        %v1504 = vsel %vm865, %v1502, -inf
        %1505 = vmax.xlane.f32.xlu0 %v1504
        %v1506 = vpop.xlane.xlu0 %1505
        %v1507 = vsub.f32 %v1502, %v1506
        %v1508 = vmul.f32 %v1507, 1.442695
        %v1509 = vpow.pop %v1508
        %v1510 = vsel %vm865, %v1509, 0.0
        %1511 = vadd.xlane.f32.xlu0 %v1510
        %v1512 = vpop.xlane.xlu0 %1511
        %v1513 = vrcp.pop %v1512
        %v1514 = vmul.f32 %v1509, %v1513
        %1515 = vrot.lane.b32.xlu0 %v1352, 56
        %v1516 = vpop.permute.xlu0 %1515
        %v1519 = vsel %vm865, %v1514, 0
        %1521 = vmatpush.msra.mxu0 0.0
        %1522 = vmatpush.msra.mxu0 0.0
        %1523 = vmatpush.msra.mxu0 0.0
        %1524 = vmatpush.msra.mxu0 0.0
        %1525 = vmatpush.msra.mxu0 0.0
        %1526 = vmatpush.msra.mxu0 0.0
        %1527 = vmatpush.msra.mxu0 0.0
        %1528 = vmatpush.msra.mxu0 0.0
        %1529 = vmatpush.msra.mxu0 0.0
        %1530 = vmatpush.msra.mxu0 0.0
        %1531 = vmatpush.msra.mxu0 0.0
        %1532 = vmatpush.msra.mxu0 0.0
        %1533 = vmatpush.msra.mxu0 0.0
        %1534 = vmatpush.msra.mxu0 0.0
        %1535 = vmatpush.msra.mxu0 0.0
        %1536 = vmatpush.msra.mxu0 %v1516
        %1537 = vmatmul.f32.gmra.mxu0 %v1519
        %v1538 = vpop.f32.mrf.mxu0
        %v1539 = vadd.f32 0.0, %v1538
        %1540 = vdwg.mxu0
        %1541 = vrot.lane.b32.xlu0 %v1379, 112
        %v1542 = vpop.permute.xlu0 %1541
        %1543 = vrot.lane.b32.xlu0 %v1410, 80
        %v1544 = vpop.permute.xlu0 %1543
        %v1545 = vsel %vm865, %v1542, 0
        %v1547 = vsel %vm865, %v1544, 0
        %1549 = vmatpush.xpose.msra.mxu0 0.0
        %1550 = vmatpush.xpose.msra.mxu0 0.0
        %1551 = vmatpush.xpose.msra.mxu0 0.0
        %1552 = vmatpush.xpose.msra.mxu0 0.0
        %1553 = vmatpush.xpose.msra.mxu0 0.0
        %1554 = vmatpush.xpose.msra.mxu0 0.0
        %1555 = vmatpush.xpose.msra.mxu0 0.0
        %1556 = vmatpush.xpose.msra.mxu0 0.0
        %1557 = vmatpush.xpose.msra.mxu0 0.0
        %1558 = vmatpush.xpose.msra.mxu0 0.0
        %1559 = vmatpush.xpose.msra.mxu0 0.0
        %1560 = vmatpush.xpose.msra.mxu0 0.0
        %1561 = vmatpush.xpose.msra.mxu0 0.0
        %1562 = vmatpush.xpose.msra.mxu0 0.0
        %1563 = vmatpush.xpose.msra.mxu0 0.0
        %1564 = vmatpush.xpose.msra.mxu0 %v1547
        %1565 = vmatmul.f32.gmra.mxu0 %v1545
        %v1566 = vpop.f32.mrf.mxu0
        %v1567 = vadd.f32 %v860, %v1566
        %1568 = vdwg.mxu0
        %v1569 = vsel %vm865, %v1567, -inf
        %1570 = vmax.xlane.f32.xlu0 %v1569
        %v1571 = vpop.xlane.xlu0 %1570
        %v1572 = vsub.f32 %v1567, %v1571
        %v1573 = vmul.f32 %v1572, 1.442695
        %v1574 = vpow.pop %v1573
        %v1575 = vsel %vm865, %v1574, 0.0
        %1576 = vadd.xlane.f32.xlu0 %v1575
        %v1577 = vpop.xlane.xlu0 %1576
        %v1578 = vrcp.pop %v1577
        %v1579 = vmul.f32 %v1574, %v1578
        %1580 = vrot.lane.b32.xlu0 %v1352, 48
        %v1581 = vpop.permute.xlu0 %1580
        %v1584 = vsel %vm865, %v1579, 0
        %1586 = vmatpush.msra.mxu0 0.0
        %1587 = vmatpush.msra.mxu0 0.0
        %1588 = vmatpush.msra.mxu0 0.0
        %1589 = vmatpush.msra.mxu0 0.0
        %1590 = vmatpush.msra.mxu0 0.0
        %1591 = vmatpush.msra.mxu0 0.0
        %1592 = vmatpush.msra.mxu0 0.0
        %1593 = vmatpush.msra.mxu0 0.0
        %1594 = vmatpush.msra.mxu0 0.0
        %1595 = vmatpush.msra.mxu0 0.0
        %1596 = vmatpush.msra.mxu0 0.0
        %1597 = vmatpush.msra.mxu0 0.0
        %1598 = vmatpush.msra.mxu0 0.0
        %1599 = vmatpush.msra.mxu0 0.0
        %1600 = vmatpush.msra.mxu0 0.0
        %1601 = vmatpush.msra.mxu0 %v1581
        %1602 = vmatmul.f32.gmra.mxu0 %v1584
        %v1603 = vpop.f32.mrf.mxu0
        %v1604 = vadd.f32 0.0, %v1603
        %1605 = vdwg.mxu0
        %1606 = vrot.lane.b32.xlu0 %v1379, 104
        %v1607 = vpop.permute.xlu0 %1606
        %1608 = vrot.lane.b32.xlu0 %v1410, 72
        %v1609 = vpop.permute.xlu0 %1608
        %v1610 = vsel %vm865, %v1607, 0
        %v1612 = vsel %vm865, %v1609, 0
        %1614 = vmatpush.xpose.msra.mxu0 0.0
        %1615 = vmatpush.xpose.msra.mxu0 0.0
        %1616 = vmatpush.xpose.msra.mxu0 0.0
        %1617 = vmatpush.xpose.msra.mxu0 0.0
        %1618 = vmatpush.xpose.msra.mxu0 0.0
        %1619 = vmatpush.xpose.msra.mxu0 0.0
        %1620 = vmatpush.xpose.msra.mxu0 0.0
        %1621 = vmatpush.xpose.msra.mxu0 0.0
        %1622 = vmatpush.xpose.msra.mxu0 0.0
        %1623 = vmatpush.xpose.msra.mxu0 0.0
        %1624 = vmatpush.xpose.msra.mxu0 0.0
        %1625 = vmatpush.xpose.msra.mxu0 0.0
        %1626 = vmatpush.xpose.msra.mxu0 0.0
        %1627 = vmatpush.xpose.msra.mxu0 0.0
        %1628 = vmatpush.xpose.msra.mxu0 0.0
        %1629 = vmatpush.xpose.msra.mxu0 %v1612
        %1630 = vmatmul.f32.gmra.mxu0 %v1610
        %v1631 = vpop.f32.mrf.mxu0
        %v1632 = vadd.f32 %v860, %v1631
        %1633 = vdwg.mxu0
        %v1634 = vsel %vm865, %v1632, -inf
        %1635 = vmax.xlane.f32.xlu0 %v1634
        %v1636 = vpop.xlane.xlu0 %1635
        %v1637 = vsub.f32 %v1632, %v1636
        %v1638 = vmul.f32 %v1637, 1.442695
        %v1639 = vpow.pop %v1638
        %v1640 = vsel %vm865, %v1639, 0.0
        %1641 = vadd.xlane.f32.xlu0 %v1640
        %v1642 = vpop.xlane.xlu0 %1641
        %v1643 = vrcp.pop %v1642
        %v1644 = vmul.f32 %v1639, %v1643
        %1645 = vrot.lane.b32.xlu0 %v1352, 40
        %v1646 = vpop.permute.xlu0 %1645
        %v1649 = vsel %vm865, %v1644, 0
        %1651 = vmatpush.msra.mxu0 0.0
        %1652 = vmatpush.msra.mxu0 0.0
        %1653 = vmatpush.msra.mxu0 0.0
        %1654 = vmatpush.msra.mxu0 0.0
        %1655 = vmatpush.msra.mxu0 0.0
        %1656 = vmatpush.msra.mxu0 0.0
        %1657 = vmatpush.msra.mxu0 0.0
        %1658 = vmatpush.msra.mxu0 0.0
        %1659 = vmatpush.msra.mxu0 0.0
        %1660 = vmatpush.msra.mxu0 0.0
        %1661 = vmatpush.msra.mxu0 0.0
        %1662 = vmatpush.msra.mxu0 0.0
        %1663 = vmatpush.msra.mxu0 0.0
        %1664 = vmatpush.msra.mxu0 0.0
        %1665 = vmatpush.msra.mxu0 0.0
        %1666 = vmatpush.msra.mxu0 %v1646
        %1667 = vmatmul.f32.gmra.mxu0 %v1649
        %v1668 = vpop.f32.mrf.mxu0
        %v1669 = vadd.f32 0.0, %v1668
        %1670 = vdwg.mxu0
        %1672 = vrot.lane.b32.xlu0 %v1539, 8
        %v1673 = vpop.permute.xlu0 %1672
        %1676 = vrot.lane.b32.xlu0 %v1604, 16
        %v1677 = vpop.permute.xlu0 %1676
        %1680 = vrot.lane.b32.xlu0 %v1669, 24
        %v1681 = vpop.permute.xlu0 %1680
        %v1683 = vsel %vm865, %v1474, %v1673
        %v1684 = vsel %vm1136, %v1683, %v1677
        %v1685 = vsel %vm1138, %v1684, %v1681
        %s1686 = scalar_lea.vmem %s9, 32
        %v1687 = vld [vmem:[%s1686] sm:$0xff]
        %v1688 = vld [vmem:[%s1686 + $0x8] sm:$0xff]
        %v1689 = vld [vmem:[%s1686 + $0x10] sm:$0xff]
        %v1690 = vld [vmem:[%s1686 + $0x18] sm:$0xff]
        %v1692 = vsel %vm729, %v1685, 0
        %1694 = vmatpush.msra.mxu0 0.0
        %1695 = vmatpush.msra.mxu0 0.0
        %1696 = vmatpush.msra.mxu0 0.0
        %1697 = vmatpush.msra.mxu0 0.0
        %1698 = vmatpush.msra.mxu0 0.0
        %1699 = vmatpush.msra.mxu0 0.0
        %1700 = vmatpush.msra.mxu0 0.0
        %1701 = vmatpush.msra.mxu0 0.0
        %1702 = vmatpush.msra.mxu0 0.0
        %1703 = vmatpush.msra.mxu0 0.0
        %1704 = vmatpush.msra.mxu0 0.0
        %1705 = vmatpush.msra.mxu0 0.0
        %1706 = vmatpush.msra.mxu0 %v1690
        %1707 = vmatpush.msra.mxu0 %v1689
        %1708 = vmatpush.msra.mxu0 %v1688
        %1709 = vmatpush.msra.mxu0 %v1687
        %1710 = vmatmul.f32.gmra.mxu0 %v1692
        %v1711 = vpop.f32.mrf.mxu0
        %v1712 = vadd.f32 0.0, %v1711
        %1713 = vdwg.mxu0
        %v1714 = vadd.f32 %v1286, %v1712
        %s1715 = scalar_lea.vmem %s10, 1
        %v1716 = vld [vmem:[%s1715] sm:$0x1]
        %v1718 = vperm.slane %v1716, 0
        %v1720 = vadd.f32 %v1714, %v1718
        %s1721 = scalar_lea.vmem %s11, 1
        %v1722 = vld [vmem:[%s1721] sm:$0x1]
        %s1723 = scalar_lea.vmem %s12, 1
        %v1724 = vld [vmem:[%s1723] sm:$0x1]
        %v1725 = vsel %vm729, %v1720, 0.0
        %1726 = vadd.xlane.f32.xlu0 %v1725
        %v1727 = vpop.xlane.xlu0 %1726
        %v1728 = vmul.f32 %v1727, %v739
        %v1729 = vsub.f32 %v1720, %v1728
        %v1730 = vmul.f32 %v1729, %v1729
        %v1731 = vsel %vm729, %v1730, 0.0
        %1732 = vadd.xlane.f32.xlu0 %v1731
        %v1733 = vpop.xlane.xlu0 %1732
        %v1734 = vmul.f32 %v1733, %v739
        %v1735 = vadd.f32 %v1734, 1e-05
        %v1736 = vrsqrt.pop %v1735
        %v1737 = vmul.f32 %v1736, %v1735
        %v1738 = vmul.f32 %v1737, %v1736
        %v1739 = vmul.f32 0.5, %v1738
        %v1740 = vsub.f32 1.5, %v1739
        %v1741 = vmul.f32 %v1736, %v1740
        %vm1742 = vweird.f32 %v1735
        %vm1743 = vweird.f32 %v1736
        %vm1744 = vmor %vm1742, %vm1743
        %v1745 = vsel %vm1744, %v1736, %v1741
        %v1746 = vmul.f32 %v1729, %v1745
        %v1748 = vperm.slane %v1722, 0
        %v1750 = vmul.f32 %v1746, %v1748
        %v1752 = vperm.slane %v1724, 0
        %v1754 = vadd.f32 %v1750, %v1752
        %s1755 = scalar_lea.vmem %s13, 32
        %v1756 = vld [vmem:[%s1755] sm:$0xff]
        %v1757 = vld [vmem:[%s1755 + $0x8] sm:$0xff]
        %v1758 = vld [vmem:[%s1755 + $0x10] sm:$0xff]
        %v1759 = vld [vmem:[%s1755 + $0x18] sm:$0xff]
        %s1760 = scalar_lea.vmem %s14, 1
        %v1761 = vld [vmem:[%s1760] sm:$0x1]
        %v1763 = vperm.slane %v1761, 0
        %v1766 = vsel %vm729, %v1754, 0
        %1768 = vmatpush.msra.mxu0 0.0
        %1769 = vmatpush.msra.mxu0 0.0
        %1770 = vmatpush.msra.mxu0 0.0
        %1771 = vmatpush.msra.mxu0 0.0
        %1772 = vmatpush.msra.mxu0 0.0
        %1773 = vmatpush.msra.mxu0 0.0
        %1774 = vmatpush.msra.mxu0 0.0
        %1775 = vmatpush.msra.mxu0 0.0
        %1776 = vmatpush.msra.mxu0 0.0
        %1777 = vmatpush.msra.mxu0 0.0
        %1778 = vmatpush.msra.mxu0 0.0
        %1779 = vmatpush.msra.mxu0 0.0
        %1780 = vmatpush.msra.mxu0 %v1759
        %1781 = vmatpush.msra.mxu0 %v1758
        %1782 = vmatpush.msra.mxu0 %v1757
        %1783 = vmatpush.msra.mxu0 %v1756
        %1784 = vmatmul.f32.gmra.mxu0 %v1766
        %v1785 = vpop.f32.mrf.mxu0
        %v1786 = vadd.f32 %v1763, %v1785
        %1787 = vdwg.mxu0
        %v1788 = vmul.f32 %v1786, 0.5
        %v1789 = vmul.f32 %v1786, 0.044715
        %v1790 = vmul.f32 %v1789, %v1786
        %v1791 = vmul.f32 %v1790, %v1786
        %v1792 = vadd.f32 %v1786, %v1791
        %v1793 = vmul.f32 %v1792, 0.7978846
        %v1794 = vtanh.pop %v1793
        %v1795 = vadd.f32 %v1794, 1.0
        %v1796 = vmul.f32 %v1788, %v1795
        %s1797 = scalar_lea.vmem %s15, 128
        %v1798 = vld [vmem:[%s1797] sm:$0xff]
        %v1799 = vld [vmem:[%s1797 + $0x8] sm:$0xff]
        %v1800 = vld [vmem:[%s1797 + $0x10] sm:$0xff]
        %v1801 = vld [vmem:[%s1797 + $0x18] sm:$0xff]
        %v1802 = vld [vmem:[%s1797 + $0x20] sm:$0xff]
        %v1803 = vld [vmem:[%s1797 + $0x28] sm:$0xff]
        %v1804 = vld [vmem:[%s1797 + $0x30] sm:$0xff]
        %v1805 = vld [vmem:[%s1797 + $0x38] sm:$0xff]
        %v1806 = vld [vmem:[%s1797 + $0x40] sm:$0xff]
        %v1807 = vld [vmem:[%s1797 + $0x48] sm:$0xff]
        %v1808 = vld [vmem:[%s1797 + $0x50] sm:$0xff]
        %v1809 = vld [vmem:[%s1797 + $0x58] sm:$0xff]
        %v1810 = vld [vmem:[%s1797 + $0x60] sm:$0xff]
        %v1811 = vld [vmem:[%s1797 + $0x68] sm:$0xff]
        %v1812 = vld [vmem:[%s1797 + $0x70] sm:$0xff]
        %v1813 = vld [vmem:[%s1797 + $0x78] sm:$0xff]
        %1814 = vmatpush.msra.mxu0 %v1813
        %1815 = vmatpush.msra.mxu0 %v1812
        %1816 = vmatpush.msra.mxu0 %v1811
        %1817 = vmatpush.msra.mxu0 %v1810
        %1818 = vmatpush.msra.mxu0 %v1809
        %1819 = vmatpush.msra.mxu0 %v1808
        %1820 = vmatpush.msra.mxu0 %v1807
        %1821 = vmatpush.msra.mxu0 %v1806
        %1822 = vmatpush.msra.mxu0 %v1805
        %1823 = vmatpush.msra.mxu0 %v1804
        %1824 = vmatpush.msra.mxu0 %v1803
        %1825 = vmatpush.msra.mxu0 %v1802
        %1826 = vmatpush.msra.mxu0 %v1801
        %1827 = vmatpush.msra.mxu0 %v1800
        %1828 = vmatpush.msra.mxu0 %v1799
        %1829 = vmatpush.msra.mxu0 %v1798
        %1830 = vmatmul.f32.gmra.mxu0 %v1796
        %v1831 = vpop.f32.mrf.mxu0
        %v1832 = vadd.f32 0.0, %v1831
        %1833 = vdwg.mxu0
        %v1834 = vadd.f32 %v1720, %v1832
        %s1835 = scalar_lea.vmem %s16, 1
        %v1836 = vld [vmem:[%s1835] sm:$0x1]
        %v1838 = vperm.slane %v1836, 0
        %v1840 = vadd.f32 %v1834, %v1838
        %v1841 = vld [vmem:[%s17] sm:$0x1]
        %v1842 = vld [vmem:[%s18] sm:$0x1]
        %vm1843 = vcmask 253952
        %v1844 = vsel %vm1843, %v1840, 0.0
        %1845 = vadd.xlane.f32.xlu0 %v1844
        %v1846 = vpop.xlane.xlu0 %1845
        %v1847 = vmul.f32 %v1846, %v739
        %v1848 = vsub.f32 %v1840, %v1847
        %v1849 = vmul.f32 %v1848, %v1848
        %v1850 = vsel %vm1843, %v1849, 0.0
        %1851 = vadd.xlane.f32.xlu0 %v1850
        %v1852 = vpop.xlane.xlu0 %1851
        %v1853 = vmul.f32 %v1852, %v739
        %v1854 = vadd.f32 %v1853, 1e-05
        %v1855 = vrsqrt.pop %v1854
        %v1856 = vmul.f32 %v1855, %v1854
        %v1857 = vmul.f32 %v1856, %v1855
        %v1858 = vmul.f32 0.5, %v1857
        %v1859 = vsub.f32 1.5, %v1858
        %v1860 = vmul.f32 %v1855, %v1859
        %vm1861 = vweird.f32 %v1854
        %vm1862 = vweird.f32 %v1855
        %vm1863 = vmor %vm1861, %vm1862
        %v1864 = vsel %vm1863, %v1855, %v1860
        %v1865 = vmul.f32 %v1848, %v1864
        %v1866 = vmul.f32 %v1865, %v1841
        %v1867 = vadd.f32 %v1866, %v1842
        %v1868 = vld [vmem:[%s19] sm:$0xff]
        %v1869 = vld [vmem:[%s19 + $0x8] sm:$0xff]
        %v1870 = vld [vmem:[%s19 + $0x10] sm:$0xff]
        %v1871 = vld [vmem:[%s19 + $0x18] sm:$0xff]
        %v1872 = vld [vmem:[%s20] sm:$0x1]
        %v1874 = vsel %vm729, %v1867, 0
        %1876 = vmatpush.msra.mxu0 0.0
        %1877 = vmatpush.msra.mxu0 0.0
        %1878 = vmatpush.msra.mxu0 0.0
        %1879 = vmatpush.msra.mxu0 0.0
        %1880 = vmatpush.msra.mxu0 0.0
        %1881 = vmatpush.msra.mxu0 0.0
        %1882 = vmatpush.msra.mxu0 0.0
        %1883 = vmatpush.msra.mxu0 0.0
        %1884 = vmatpush.msra.mxu0 0.0
        %1885 = vmatpush.msra.mxu0 0.0
        %1886 = vmatpush.msra.mxu0 0.0
        %1887 = vmatpush.msra.mxu0 0.0
        %1888 = vmatpush.msra.mxu0 %v1871
        %1889 = vmatpush.msra.mxu0 %v1870
        %1890 = vmatpush.msra.mxu0 %v1869
        %1891 = vmatpush.msra.mxu0 %v1868
        %1892 = vmatmul.f32.gmra.mxu0 %v1874
        %v1893 = vpop.f32.mrf.mxu0
        %v1894 = vadd.f32 %v1872, %v1893
        %1895 = vdwg.mxu0
        %v1896 = vmul.f32 %v1894, 0.5
        %v1897 = vmul.f32 %v1894, 0.044715
        %v1898 = vmul.f32 %v1897, %v1894
        %v1899 = vmul.f32 %v1898, %v1894
        %v1900 = vadd.f32 %v1894, %v1899
        %v1901 = vmul.f32 %v1900, 0.7978846
        %v1902 = vtanh.pop %v1901
        %v1903 = vadd.f32 %v1902, 1.0
        %v1904 = vmul.f32 %v1896, %v1903
        %v1905 = vld [vmem:[%s21] sm:$0xff]
        %v1906 = vld [vmem:[%s21 + $0x8] sm:$0xff]
        %v1907 = vld [vmem:[%s22] sm:$0x1]
        %v1909 = vsel %vm1136, %v1904, 0
        %1911 = vmatpush.msra.mxu0 0.0
        %1912 = vmatpush.msra.mxu0 0.0
        %1913 = vmatpush.msra.mxu0 0.0
        %1914 = vmatpush.msra.mxu0 0.0
        %1915 = vmatpush.msra.mxu0 0.0
        %1916 = vmatpush.msra.mxu0 0.0
        %1917 = vmatpush.msra.mxu0 0.0
        %1918 = vmatpush.msra.mxu0 0.0
        %1919 = vmatpush.msra.mxu0 0.0
        %1920 = vmatpush.msra.mxu0 0.0
        %1921 = vmatpush.msra.mxu0 0.0
        %1922 = vmatpush.msra.mxu0 0.0
        %1923 = vmatpush.msra.mxu0 0.0
        %1924 = vmatpush.msra.mxu0 0.0
        %1925 = vmatpush.msra.mxu0 %v1906
        %1926 = vmatpush.msra.mxu0 %v1905
        %1927 = vmatmul.f32.gmra.mxu0 %v1909
        %v1928 = vpop.f32.mrf.mxu0
        %v1929 = vadd.f32 %v1907, %v1928
        %1930 = vdwg.mxu0
        %1931 = vst [vmem:[%s711] sm:$0x1] %v1929
        %s1932 = sand.u32 %s538, 1
        %s1933 = scalar_lea.sflag [#allocation3], %s1932
        %s1934 = sand.u32 %s538, 1
        %s1935 = scalar_lea.vmem [#allocation2], %s1934
        // Predicated region
        $region113: #{tpu_custom_call.1} parent=111 // pred_check
          %p1936 = pneg %p548
        $region114: #{tpu_custom_call.1} parent=111 // pred_check_branch
          %1938 = sbr.rel (%p1936) target = $region116
        $region115: #{tpu_custom_call.1} parent=111 // pred_region
          %1940 = vsyncadd %s1933, 0
          %s1941 = scalar_lea.hbm %s23, %s37
          %s1943 = sshll.u32 %s1935, 4
          %s1944 = int_to_ptr.vmem [resolvable:$true] %s1943
          %s1945 = sshll.u32 %s1941, 4
          %s1946 = int_to_ptr.hbm [resolvable:$true] %s1945
          %1948 = dma.vmem_to_hbm [thread:$0]  %s1944, 16, %s1946, %s1933
        $region116: #{tpu_custom_call.1} parent=111 // pred_fallthru
          _
      $region112: #{tpu_custom_call.1} parent=5 // pred_fallthru
        _
      %p1949 = scmp.le.s32.totalorder 2, %s32
      // Predicated region
      $region117: #{tpu_custom_call.1} parent=5 // pred_check
        %p1950 = pneg %p1949
      $region118: #{tpu_custom_call.1} parent=5 // pred_check_branch
        %1952 = sbr.rel (%p1950) target = $region120
      $region119: #{tpu_custom_call.1} parent=5 // pred_region
        %s1953 = ssub.s32 %s32, 2
        // Predicated region
        $region121: #{tpu_custom_call.1} parent=119 // pred_check
          %p1954 = pneg %p554
        $region122: #{tpu_custom_call.1} parent=119 // pred_check_branch
          %1956 = sbr.rel (%p1954) target = $region124
        $region123: #{tpu_custom_call.1} parent=119 // pred_region
          %s1957 = sand.u32 %s539, 1
          %s1958 = scalar_lea.sflag [#allocation3], %s1957
          %s1959 = sand.u32 %s539, 1
          %s1960 = scalar_lea.vmem [#allocation2], %s1959
          %1962 = dma.done %s1958, 16
        $region124: #{tpu_custom_call.1} parent=119 // pred_fallthru
          _
      $region120: #{tpu_custom_call.1} parent=5 // pred_fallthru
        _
    $region6: #{tpu_custom_call.1} parent=1 // loop_footer
      %s36 = sadd.s32 1, %s32
    $region7: #{tpu_custom_call.1} parent=1 // loop_footer_branch
      %31 = sbr.rel target = $region3
    $region8: #{tpu_custom_call.1} parent=1 // loop_exit
      _
    %1963 = vsyncpa [#allocation3], 1
    %s1964 = scalar_lea.sflag [#allocation3], 1
    %1965 = vsyncpa %s1964, 1

</llo_original>
